<compile_context>
chip_gen: v7x
topology: tpu7x:2x2x1
jax: 0.10.0
libtpu: 0.0.40
codegen_flags: <defaults>
</compile_context>

<pallas_src>
import functools

import jax
import jax.numpy as jnp
from jax import lax
from jax.experimental import pallas as pl
from jax.experimental.pallas import tpu as pltpu


def _pam_kernel(rgb_ref, freq_ref, w_ref, b_ref, vr_ref, vf_ref,
                out_ref, acc0_ref, acc1_ref, *, C, H, W):
    """Per-batch PAM forward (NCHW inside the kernel).

    rgb_ref, freq_ref  : (1, C, H, W)  VMEM
    w_ref              : (2*2C*3*3,)   SMEM  flat OIHW conv weight (f32)
    b_ref              : (2,)          SMEM  conv bias (f32)
    vr_ref, vf_ref     : (C,)          SMEM  per-channel gains (f32)
    out_ref            : (1, C, H, W)  VMEM
    acc0_ref, acc1_ref : (H, W)        VMEM f32 scratch (attention logits)
    """
    f32 = jnp.float32

    # Load each channel plane once (explicit upcast to f32 for accumulation).
    rgb = [rgb_ref[0, c].astype(f32) for c in range(C)]
    freq = [freq_ref[0, c].astype(f32) for c in range(C)]

    def widx(o, i, ky, kx):  # flat index into the OIHW (2, 2C, 3, 3) weights
        return ((o * 2 * C + i) * 3 + ky) * 3 + kx

    # 3x3 "same" conv with 2 output channels, as VPU shifted adds:
    #   att[o, y, x] = b[o]
    #       + sum_{ky,kx,c} w[o, c, ky, kx] * cat(rgb, freq)[c, y+ky-1, x+kx-1]
    acc0_ref[...] = jnp.zeros((H, W), f32)
    acc1_ref[...] = jnp.zeros((H, W), f32)
    for ky in range(3):
        for kx in range(3):
            dy, dx = ky - 1, kx - 1
            # source window read from the input planes
            sy0, sy1 = max(0, dy), H + min(0, dy)
            sx0, sx1 = max(0, dx), W + min(0, dx)
            # destination window of the attention logits
            ty0, ty1 = max(0, -dy), H + min(0, -dy)
            tx0, tx1 = max(0, -dx), W + min(0, -dx)

            s0 = None
            s1 = None
            for c in range(C):
                r, f = rgb[c], freq[c]
                t0 = (w_ref[widx(0, c, ky, kx)] * r
                      + w_ref[widx(0, C + c, ky, kx)] * f)
                t1 = (w_ref[widx(1, c, ky, kx)] * r
                      + w_ref[widx(1, C + c, ky, kx)] * f)
                s0 = t0 if s0 is None else s0 + t0
                s1 = t1 if s1 is None else s1 + t1

            acc0_ref[ty0:ty1, tx0:tx1] += s0[sy0:sy1, sx0:sx1]
            acc1_ref[ty0:ty1, tx0:tx1] += s1[sy0:sy1, sx0:sx1]

    # Two separate attention planes (EUP sigmoid, scalar bias broadcast).
    a0 = jax.nn.sigmoid(acc0_ref[...] + b_ref[0])   # gate for rgb
    a1 = jax.nn.sigmoid(acc1_ref[...] + b_ref[1])   # gate for freq

    # out[c] = a0 * rgb[c] * v_rgb[c] + a1 * freq[c] * v_freq[c]
    for c in range(C):
        out = a0 * rgb[c] * vr_ref[c] + a1 * freq[c] * vf_ref[c]
        out_ref[0, c] = out.astype(out_ref.dtype)


def pam_forward(rgb, freq, conv_w, conv_b, v_rgb, v_freq):
    """PAM forward. Inputs/outputs NCHW (PyTorch convention)."""
    B, C, H, W = rgb.shape
    assert freq.shape == (B, C, H, W)
    assert conv_w.shape == (2, 2 * C, 3, 3)

    # Tiny parameters go to SMEM as flat f32 vectors (scalar-broadcast use).
    w_flat = conv_w.astype(jnp.float32).reshape(-1)    # (2*2C*3*3,)
    b_flat = conv_b.astype(jnp.float32).reshape(-1)    # (2,)
    vr_flat = v_rgb.astype(jnp.float32).reshape(-1)    # (C,)
    vf_flat = v_freq.astype(jnp.float32).reshape(-1)   # (C,)

    kernel = functools.partial(_pam_kernel, C=C, H=H, W=W)
    smem_spec = pl.BlockSpec(memory_space=pltpu.MemorySpace.SMEM)

    return pl.pallas_call(
        kernel,
        out_shape=jax.ShapeDtypeStruct((B, C, H, W), rgb.dtype),
        grid=(B,),
        in_specs=[
            pl.BlockSpec((1, C, H, W), lambda b: (b, 0, 0, 0)),
            pl.BlockSpec((1, C, H, W), lambda b: (b, 0, 0, 0)),
            smem_spec,   # conv weights
            smem_spec,   # conv bias
            smem_spec,   # v_rgb
            smem_spec,   # v_freq
        ],
        out_specs=pl.BlockSpec((1, C, H, W), lambda b: (b, 0, 0, 0)),
        scratch_shapes=[pltpu.VMEM((H, W), jnp.float32),
                        pltpu.VMEM((H, W), jnp.float32)],
        compiler_params=pltpu.CompilerParams(
            dimension_semantics=("parallel",)),
    )(rgb, freq, w_flat, b_flat, vr_flat, vf_flat)


def pam_reference(rgb, freq, conv_w, conv_b, v_rgb, v_freq):
    """Pure-JAX reference matching the PyTorch module (NCHW)."""
    x = jnp.concatenate([rgb, freq], axis=1)
    att = lax.conv_general_dilated(
        x, conv_w, window_strides=(1, 1), padding="SAME",
        dimension_numbers=("NCHW", "OIHW", "NCHW"))
    att = att + conv_b.reshape(1, 2, 1, 1)
    att = jax.nn.sigmoid(att)
    return att[:, 0:1] * rgb * v_rgb + att[:, 1:2] * freq * v_freq


if __name__ == "__main__":
    B, C, H, W = 2, 4, 16, 16

    key = jax.random.PRNGKey(0)
    k_w, k_b, k_vr, k_vf, k_rgb, k_freq = jax.random.split(key, 6)

    # Deterministic synthetic parameters (shapes from PAM.__init__ with in_dim=C).
    conv_w = 0.1 * jax.random.normal(k_w, (2, 2 * C, 3, 3), jnp.float32)
    conv_b = 0.1 * jax.random.normal(k_b, (2,), jnp.float32)
    v_rgb = jax.random.normal(k_vr, (1, C, 1, 1), jnp.float32)
    v_freq = jax.random.normal(k_vf, (1, C, 1, 1), jnp.float32)

    rgb = jax.random.normal(k_rgb, (B, C, H, W), jnp.float32)
    freq = jax.random.normal(k_freq, (B, C, H, W), jnp.float32)

    out = jax.block_until_ready(
        pam_forward(rgb, freq, conv_w, conv_b, v_rgb, v_freq))
    ref = jax.block_until_ready(
        pam_reference(rgb, freq, conv_w, conv_b, v_rgb, v_freq))

    assert out.shape == (B, C, H, W)
    assert jnp.allclose(out, ref, atol=1e-4, rtol=1e-4), (
        f"max abs err = {jnp.max(jnp.abs(out - ref))}")

    print("KERNEL_OK")
</pallas_src>

<mosaic_0001>
module attributes {stable_mosaic.version = 11 : i64} {
  func.func @_pam_kernel(%arg0: i32, %arg1: memref<1x4x16x16xf32, #tpu.memory_space<vmem>>, %arg2: memref<1x4x16x16xf32, #tpu.memory_space<vmem>>, %arg3: memref<144xf32, #tpu.memory_space<smem>>, %arg4: memref<2xf32, #tpu.memory_space<smem>>, %arg5: memref<4xf32, #tpu.memory_space<smem>>, %arg6: memref<4xf32, #tpu.memory_space<smem>>, %arg7: memref<1x4x16x16xf32, #tpu.memory_space<vmem>>, %arg8: memref<16x16xf32, #tpu.memory_space<vmem>>, %arg9: memref<16x16xf32, #tpu.memory_space<vmem>>) attributes {dimension_semantics = [#tpu.dimension_semantics<parallel>], iteration_bounds = array<i64: 2>, scalar_prefetch = 0 : i64, scratch_operands = 2 : i64, tpu.core_type = #tpu.core_type<tc>, window_params = [{transform_indices = @transform_0, window_bounds = array<i64: 1, 4, 16, 16>}, {transform_indices = @transform_1, window_bounds = array<i64: 1, 4, 16, 16>}, {transform_indices = @transform_2, window_bounds = array<i64: 144>}, {transform_indices = @transform_3, window_bounds = array<i64: 2>}, {transform_indices = @transform_4, window_bounds = array<i64: 4>}, {transform_indices = @transform_5, window_bounds = array<i64: 4>}, {transform_indices = @transform_6, window_bounds = array<i64: 1, 4, 16, 16>}]} {
    %c0 = arith.constant 0 : index
    %c0_0 = arith.constant 0 : index
    %c0_1 = arith.constant 0 : index
    %c0_2 = arith.constant 0 : index
    %0 = vector.load %arg1[%c0, %c0_0, %c0_1, %c0_2] : memref<1x4x16x16xf32, #tpu.memory_space<vmem>>, vector<1x1x16x16xf32>
    %1 = vector.shape_cast %0 : vector<1x1x16x16xf32> to vector<16x16xf32>
    %c0_3 = arith.constant 0 : index
    %c1 = arith.constant 1 : index
    %c0_4 = arith.constant 0 : index
    %c0_5 = arith.constant 0 : index
    %2 = vector.load %arg1[%c0_3, %c1, %c0_4, %c0_5] : memref<1x4x16x16xf32, #tpu.memory_space<vmem>>, vector<1x1x16x16xf32>
    %3 = vector.shape_cast %2 : vector<1x1x16x16xf32> to vector<16x16xf32>
    %c0_6 = arith.constant 0 : index
    %c2 = arith.constant 2 : index
    %c0_7 = arith.constant 0 : index
    %c0_8 = arith.constant 0 : index
    %4 = vector.load %arg1[%c0_6, %c2, %c0_7, %c0_8] : memref<1x4x16x16xf32, #tpu.memory_space<vmem>>, vector<1x1x16x16xf32>
    %5 = vector.shape_cast %4 : vector<1x1x16x16xf32> to vector<16x16xf32>
    %c0_9 = arith.constant 0 : index
    %c3 = arith.constant 3 : index
    %c0_10 = arith.constant 0 : index
    %c0_11 = arith.constant 0 : index
    %6 = vector.load %arg1[%c0_9, %c3, %c0_10, %c0_11] : memref<1x4x16x16xf32, #tpu.memory_space<vmem>>, vector<1x1x16x16xf32>
    %7 = vector.shape_cast %6 : vector<1x1x16x16xf32> to vector<16x16xf32>
    %c0_12 = arith.constant 0 : index
    %c0_13 = arith.constant 0 : index
    %c0_14 = arith.constant 0 : index
    %c0_15 = arith.constant 0 : index
    %8 = vector.load %arg2[%c0_12, %c0_13, %c0_14, %c0_15] : memref<1x4x16x16xf32, #tpu.memory_space<vmem>>, vector<1x1x16x16xf32>
    %9 = vector.shape_cast %8 : vector<1x1x16x16xf32> to vector<16x16xf32>
    %c0_16 = arith.constant 0 : index
    %c1_17 = arith.constant 1 : index
    %c0_18 = arith.constant 0 : index
    %c0_19 = arith.constant 0 : index
    %10 = vector.load %arg2[%c0_16, %c1_17, %c0_18, %c0_19] : memref<1x4x16x16xf32, #tpu.memory_space<vmem>>, vector<1x1x16x16xf32>
    %11 = vector.shape_cast %10 : vector<1x1x16x16xf32> to vector<16x16xf32>
    %c0_20 = arith.constant 0 : index
    %c2_21 = arith.constant 2 : index
    %c0_22 = arith.constant 0 : index
    %c0_23 = arith.constant 0 : index
    %12 = vector.load %arg2[%c0_20, %c2_21, %c0_22, %c0_23] : memref<1x4x16x16xf32, #tpu.memory_space<vmem>>, vector<1x1x16x16xf32>
    %13 = vector.shape_cast %12 : vector<1x1x16x16xf32> to vector<16x16xf32>
    %c0_24 = arith.constant 0 : index
    %c3_25 = arith.constant 3 : index
    %c0_26 = arith.constant 0 : index
    %c0_27 = arith.constant 0 : index
    %14 = vector.load %arg2[%c0_24, %c3_25, %c0_26, %c0_27] : memref<1x4x16x16xf32, #tpu.memory_space<vmem>>, vector<1x1x16x16xf32>
    %15 = vector.shape_cast %14 : vector<1x1x16x16xf32> to vector<16x16xf32>
    %cst = arith.constant 0.000000e+00 : f32
    %16 = vector.broadcast %cst : f32 to vector<16x16xf32>
    %c0_28 = arith.constant 0 : index
    %c0_29 = arith.constant 0 : index
    %17 = vector.load %arg8[%c0_28, %c0_29] : memref<16x16xf32, #tpu.memory_space<vmem>>, vector<16x16xf32>
    tpu.vector_store %arg8[%c0_28, %c0_29], %16 {strides = array<i32>} : memref<16x16xf32, #tpu.memory_space<vmem>>, vector<16x16xf32>,
    %cst_30 = arith.constant 0.000000e+00 : f32
    %18 = vector.broadcast %cst_30 : f32 to vector<16x16xf32>
    %c0_31 = arith.constant 0 : index
    %c0_32 = arith.constant 0 : index
    %19 = vector.load %arg9[%c0_31, %c0_32] : memref<16x16xf32, #tpu.memory_space<vmem>>, vector<16x16xf32>
    tpu.vector_store %arg9[%c0_31, %c0_32], %18 {strides = array<i32>} : memref<16x16xf32, #tpu.memory_space<vmem>>, vector<16x16xf32>,
    %c0_33 = arith.constant 0 : index
    %20 = memref.load %arg3[%c0_33] : memref<144xf32, #tpu.memory_space<smem>>
    %21 = vector.broadcast %20 : f32 to vector<16x16xf32>
    %22 = arith.mulf %21, %1 : vector<16x16xf32>
    %c36 = arith.constant 36 : index
    %23 = memref.load %arg3[%c36] : memref<144xf32, #tpu.memory_space<smem>>
    %24 = vector.broadcast %23 : f32 to vector<16x16xf32>
    %25 = arith.mulf %24, %9 : vector<16x16xf32>
    %26 = arith.addf %22, %25 : vector<16x16xf32>
    %c72 = arith.constant 72 : index
    %27 = memref.load %arg3[%c72] : memref<144xf32, #tpu.memory_space<smem>>
    %28 = vector.broadcast %27 : f32 to vector<16x16xf32>
    %29 = arith.mulf %28, %1 : vector<16x16xf32>
    %c108 = arith.constant 108 : index
    %30 = memref.load %arg3[%c108] : memref<144xf32, #tpu.memory_space<smem>>
    %31 = vector.broadcast %30 : f32 to vector<16x16xf32>
    %32 = arith.mulf %31, %9 : vector<16x16xf32>
    %33 = arith.addf %29, %32 : vector<16x16xf32>
    %c9 = arith.constant 9 : index
    %34 = memref.load %arg3[%c9] : memref<144xf32, #tpu.memory_space<smem>>
    %35 = vector.broadcast %34 : f32 to vector<16x16xf32>
    %36 = arith.mulf %35, %3 : vector<16x16xf32>
    %c45 = arith.constant 45 : index
    %37 = memref.load %arg3[%c45] : memref<144xf32, #tpu.memory_space<smem>>
    %38 = vector.broadcast %37 : f32 to vector<16x16xf32>
    %39 = arith.mulf %38, %11 : vector<16x16xf32>
    %40 = arith.addf %36, %39 : vector<16x16xf32>
    %c81 = arith.constant 81 : index
    %41 = memref.load %arg3[%c81] : memref<144xf32, #tpu.memory_space<smem>>
    %42 = vector.broadcast %41 : f32 to vector<16x16xf32>
    %43 = arith.mulf %42, %3 : vector<16x16xf32>
    %c117 = arith.constant 117 : index
    %44 = memref.load %arg3[%c117] : memref<144xf32, #tpu.memory_space<smem>>
    %45 = vector.broadcast %44 : f32 to vector<16x16xf32>
    %46 = arith.mulf %45, %11 : vector<16x16xf32>
    %47 = arith.addf %43, %46 : vector<16x16xf32>
    %48 = arith.addf %26, %40 : vector<16x16xf32>
    %49 = arith.addf %33, %47 : vector<16x16xf32>
    %c18 = arith.constant 18 : index
    %50 = memref.load %arg3[%c18] : memref<144xf32, #tpu.memory_space<smem>>
    %51 = vector.broadcast %50 : f32 to vector<16x16xf32>
    %52 = arith.mulf %51, %5 : vector<16x16xf32>
    %c54 = arith.constant 54 : index
    %53 = memref.load %arg3[%c54] : memref<144xf32, #tpu.memory_space<smem>>
    %54 = vector.broadcast %53 : f32 to vector<16x16xf32>
    %55 = arith.mulf %54, %13 : vector<16x16xf32>
    %56 = arith.addf %52, %55 : vector<16x16xf32>
    %c90 = arith.constant 90 : index
    %57 = memref.load %arg3[%c90] : memref<144xf32, #tpu.memory_space<smem>>
    %58 = vector.broadcast %57 : f32 to vector<16x16xf32>
    %59 = arith.mulf %58, %5 : vector<16x16xf32>
    %c126 = arith.constant 126 : index
    %60 = memref.load %arg3[%c126] : memref<144xf32, #tpu.memory_space<smem>>
    %61 = vector.broadcast %60 : f32 to vector<16x16xf32>
    %62 = arith.mulf %61, %13 : vector<16x16xf32>
    %63 = arith.addf %59, %62 : vector<16x16xf32>
    %64 = arith.addf %48, %56 : vector<16x16xf32>
    %65 = arith.addf %49, %63 : vector<16x16xf32>
    %c27 = arith.constant 27 : index
    %66 = memref.load %arg3[%c27] : memref<144xf32, #tpu.memory_space<smem>>
    %67 = vector.broadcast %66 : f32 to vector<16x16xf32>
    %68 = arith.mulf %67, %7 : vector<16x16xf32>
    %c63 = arith.constant 63 : index
    %69 = memref.load %arg3[%c63] : memref<144xf32, #tpu.memory_space<smem>>
    %70 = vector.broadcast %69 : f32 to vector<16x16xf32>
    %71 = arith.mulf %70, %15 : vector<16x16xf32>
    %72 = arith.addf %68, %71 : vector<16x16xf32>
    %c99 = arith.constant 99 : index
    %73 = memref.load %arg3[%c99] : memref<144xf32, #tpu.memory_space<smem>>
    %74 = vector.broadcast %73 : f32 to vector<16x16xf32>
    %75 = arith.mulf %74, %7 : vector<16x16xf32>
    %c135 = arith.constant 135 : index
    %76 = memref.load %arg3[%c135] : memref<144xf32, #tpu.memory_space<smem>>
    %77 = vector.broadcast %76 : f32 to vector<16x16xf32>
    %78 = arith.mulf %77, %15 : vector<16x16xf32>
    %79 = arith.addf %75, %78 : vector<16x16xf32>
    %80 = arith.addf %64, %72 : vector<16x16xf32>
    %81 = arith.addf %65, %79 : vector<16x16xf32>
    %c1_34 = arith.constant 1 : index
    %c1_35 = arith.constant 1 : index
    %82 = vector.load %arg8[%c1_34, %c1_35] : memref<16x16xf32, #tpu.memory_space<vmem>>, vector<15x15xf32>
    %83 = vector.extract_strided_slice %80 {offsets = [0, 0], sizes = [15, 15], strides = [1, 1]} : vector<16x16xf32> to vector<15x15xf32>
    %84 = arith.addf %82, %83 : vector<15x15xf32>
    %c1_36 = arith.constant 1 : index
    %c1_37 = arith.constant 1 : index
    %85 = vector.load %arg8[%c1_36, %c1_37] : memref<16x16xf32, #tpu.memory_space<vmem>>, vector<15x15xf32>
    tpu.vector_store %arg8[%c1_36, %c1_37], %84 {strides = array<i32>} : memref<16x16xf32, #tpu.memory_space<vmem>>, vector<15x15xf32>,
    %c1_38 = arith.constant 1 : index
    %c1_39 = arith.constant 1 : index
    %86 = vector.load %arg9[%c1_38, %c1_39] : memref<16x16xf32, #tpu.memory_space<vmem>>, vector<15x15xf32>
    %87 = vector.extract_strided_slice %81 {offsets = [0, 0], sizes = [15, 15], strides = [1, 1]} : vector<16x16xf32> to vector<15x15xf32>
    %88 = arith.addf %86, %87 : vector<15x15xf32>
    %c1_40 = arith.constant 1 : index
    %c1_41 = arith.constant 1 : index
    %89 = vector.load %arg9[%c1_40, %c1_41] : memref<16x16xf32, #tpu.memory_space<vmem>>, vector<15x15xf32>
    tpu.vector_store %arg9[%c1_40, %c1_41], %88 {strides = array<i32>} : memref<16x16xf32, #tpu.memory_space<vmem>>, vector<15x15xf32>,
    %c1_42 = arith.constant 1 : index
    %90 = memref.load %arg3[%c1_42] : memref<144xf32, #tpu.memory_space<smem>>
    %91 = vector.broadcast %90 : f32 to vector<16x16xf32>
    %92 = arith.mulf %91, %1 : vector<16x16xf32>
    %c37 = arith.constant 37 : index
    %93 = memref.load %arg3[%c37] : memref<144xf32, #tpu.memory_space<smem>>
    %94 = vector.broadcast %93 : f32 to vector<16x16xf32>
    %95 = arith.mulf %94, %9 : vector<16x16xf32>
    %96 = arith.addf %92, %95 : vector<16x16xf32>
    %c73 = arith.constant 73 : index
    %97 = memref.load %arg3[%c73] : memref<144xf32, #tpu.memory_space<smem>>
    %98 = vector.broadcast %97 : f32 to vector<16x16xf32>
    %99 = arith.mulf %98, %1 : vector<16x16xf32>
    %c109 = arith.constant 109 : index
    %100 = memref.load %arg3[%c109] : memref<144xf32, #tpu.memory_space<smem>>
    %101 = vector.broadcast %100 : f32 to vector<16x16xf32>
    %102 = arith.mulf %101, %9 : vector<16x16xf32>
    %103 = arith.addf %99, %102 : vector<16x16xf32>
    %c10 = arith.constant 10 : index
    %104 = memref.load %arg3[%c10] : memref<144xf32, #tpu.memory_space<smem>>
    %105 = vector.broadcast %104 : f32 to vector<16x16xf32>
    %106 = arith.mulf %105, %3 : vector<16x16xf32>
    %c46 = arith.constant 46 : index
    %107 = memref.load %arg3[%c46] : memref<144xf32, #tpu.memory_space<smem>>
    %108 = vector.broadcast %107 : f32 to vector<16x16xf32>
    %109 = arith.mulf %108, %11 : vector<16x16xf32>
    %110 = arith.addf %106, %109 : vector<16x16xf32>
    %c82 = arith.constant 82 : index
    %111 = memref.load %arg3[%c82] : memref<144xf32, #tpu.memory_space<smem>>
    %112 = vector.broadcast %111 : f32 to vector<16x16xf32>
    %113 = arith.mulf %112, %3 : vector<16x16xf32>
    %c118 = arith.constant 118 : index
    %114 = memref.load %arg3[%c118] : memref<144xf32, #tpu.memory_space<smem>>
    %115 = vector.broadcast %114 : f32 to vector<16x16xf32>
    %116 = arith.mulf %115, %11 : vector<16x16xf32>
    %117 = arith.addf %113, %116 : vector<16x16xf32>
    %118 = arith.addf %96, %110 : vector<16x16xf32>
    %119 = arith.addf %103, %117 : vector<16x16xf32>
    %c19 = arith.constant 19 : index
    %120 = memref.load %arg3[%c19] : memref<144xf32, #tpu.memory_space<smem>>
    %121 = vector.broadcast %120 : f32 to vector<16x16xf32>
    %122 = arith.mulf %121, %5 : vector<16x16xf32>
    %c55 = arith.constant 55 : index
    %123 = memref.load %arg3[%c55] : memref<144xf32, #tpu.memory_space<smem>>
    %124 = vector.broadcast %123 : f32 to vector<16x16xf32>
    %125 = arith.mulf %124, %13 : vector<16x16xf32>
    %126 = arith.addf %122, %125 : vector<16x16xf32>
    %c91 = arith.constant 91 : index
    %127 = memref.load %arg3[%c91] : memref<144xf32, #tpu.memory_space<smem>>
    %128 = vector.broadcast %127 : f32 to vector<16x16xf32>
    %129 = arith.mulf %128, %5 : vector<16x16xf32>
    %c127 = arith.constant 127 : index
    %130 = memref.load %arg3[%c127] : memref<144xf32, #tpu.memory_space<smem>>
    %131 = vector.broadcast %130 : f32 to vector<16x16xf32>
    %132 = arith.mulf %131, %13 : vector<16x16xf32>
    %133 = arith.addf %129, %132 : vector<16x16xf32>
    %134 = arith.addf %118, %126 : vector<16x16xf32>
    %135 = arith.addf %119, %133 : vector<16x16xf32>
    %c28 = arith.constant 28 : index
    %136 = memref.load %arg3[%c28] : memref<144xf32, #tpu.memory_space<smem>>
    %137 = vector.broadcast %136 : f32 to vector<16x16xf32>
    %138 = arith.mulf %137, %7 : vector<16x16xf32>
    %c64 = arith.constant 64 : index
    %139 = memref.load %arg3[%c64] : memref<144xf32, #tpu.memory_space<smem>>
    %140 = vector.broadcast %139 : f32 to vector<16x16xf32>
    %141 = arith.mulf %140, %15 : vector<16x16xf32>
    %142 = arith.addf %138, %141 : vector<16x16xf32>
    %c100 = arith.constant 100 : index
    %143 = memref.load %arg3[%c100] : memref<144xf32, #tpu.memory_space<smem>>
    %144 = vector.broadcast %143 : f32 to vector<16x16xf32>
    %145 = arith.mulf %144, %7 : vector<16x16xf32>
    %c136 = arith.constant 136 : index
    %146 = memref.load %arg3[%c136] : memref<144xf32, #tpu.memory_space<smem>>
    %147 = vector.broadcast %146 : f32 to vector<16x16xf32>
    %148 = arith.mulf %147, %15 : vector<16x16xf32>
    %149 = arith.addf %145, %148 : vector<16x16xf32>
    %150 = arith.addf %134, %142 : vector<16x16xf32>
    %151 = arith.addf %135, %149 : vector<16x16xf32>
    %c1_43 = arith.constant 1 : index
    %c0_44 = arith.constant 0 : index
    %152 = vector.load %arg8[%c1_43, %c0_44] : memref<16x16xf32, #tpu.memory_space<vmem>>, vector<15x16xf32>
    %153 = vector.extract_strided_slice %150 {offsets = [0, 0], sizes = [15, 16], strides = [1, 1]} : vector<16x16xf32> to vector<15x16xf32>
    %154 = arith.addf %152, %153 : vector<15x16xf32>
    %c1_45 = arith.constant 1 : index
    %c0_46 = arith.constant 0 : index
    %155 = vector.load %arg8[%c1_45, %c0_46] : memref<16x16xf32, #tpu.memory_space<vmem>>, vector<15x16xf32>
    tpu.vector_store %arg8[%c1_45, %c0_46], %154 {strides = array<i32>} : memref<16x16xf32, #tpu.memory_space<vmem>>, vector<15x16xf32>,
    %c1_47 = arith.constant 1 : index
    %c0_48 = arith.constant 0 : index
    %156 = vector.load %arg9[%c1_47, %c0_48] : memref<16x16xf32, #tpu.memory_space<vmem>>, vector<15x16xf32>
    %157 = vector.extract_strided_slice %151 {offsets = [0, 0], sizes = [15, 16], strides = [1, 1]} : vector<16x16xf32> to vector<15x16xf32>
    %158 = arith.addf %156, %157 : vector<15x16xf32>
    %c1_49 = arith.constant 1 : index
    %c0_50 = arith.constant 0 : index
    %159 = vector.load %arg9[%c1_49, %c0_50] : memref<16x16xf32, #tpu.memory_space<vmem>>, vector<15x16xf32>
    tpu.vector_store %arg9[%c1_49, %c0_50], %158 {strides = array<i32>} : memref<16x16xf32, #tpu.memory_space<vmem>>, vector<15x16xf32>,
    %c2_51 = arith.constant 2 : index
    %160 = memref.load %arg3[%c2_51] : memref<144xf32, #tpu.memory_space<smem>>
    %161 = vector.broadcast %160 : f32 to vector<16x16xf32>
    %162 = arith.mulf %161, %1 : vector<16x16xf32>
    %c38 = arith.constant 38 : index
    %163 = memref.load %arg3[%c38] : memref<144xf32, #tpu.memory_space<smem>>
    %164 = vector.broadcast %163 : f32 to vector<16x16xf32>
    %165 = arith.mulf %164, %9 : vector<16x16xf32>
    %166 = arith.addf %162, %165 : vector<16x16xf32>
    %c74 = arith.constant 74 : index
    %167 = memref.load %arg3[%c74] : memref<144xf32, #tpu.memory_space<smem>>
    %168 = vector.broadcast %167 : f32 to vector<16x16xf32>
    %169 = arith.mulf %168, %1 : vector<16x16xf32>
    %c110 = arith.constant 110 : index
    %170 = memref.load %arg3[%c110] : memref<144xf32, #tpu.memory_space<smem>>
    %171 = vector.broadcast %170 : f32 to vector<16x16xf32>
    %172 = arith.mulf %171, %9 : vector<16x16xf32>
    %173 = arith.addf %169, %172 : vector<16x16xf32>
    %c11 = arith.constant 11 : index
    %174 = memref.load %arg3[%c11] : memref<144xf32, #tpu.memory_space<smem>>
    %175 = vector.broadcast %174 : f32 to vector<16x16xf32>
    %176 = arith.mulf %175, %3 : vector<16x16xf32>
    %c47 = arith.constant 47 : index
    %177 = memref.load %arg3[%c47] : memref<144xf32, #tpu.memory_space<smem>>
    %178 = vector.broadcast %177 : f32 to vector<16x16xf32>
    %179 = arith.mulf %178, %11 : vector<16x16xf32>
    %180 = arith.addf %176, %179 : vector<16x16xf32>
    %c83 = arith.constant 83 : index
    %181 = memref.load %arg3[%c83] : memref<144xf32, #tpu.memory_space<smem>>
    %182 = vector.broadcast %181 : f32 to vector<16x16xf32>
    %183 = arith.mulf %182, %3 : vector<16x16xf32>
    %c119 = arith.constant 119 : index
    %184 = memref.load %arg3[%c119] : memref<144xf32, #tpu.memory_space<smem>>
    %185 = vector.broadcast %184 : f32 to vector<16x16xf32>
    %186 = arith.mulf %185, %11 : vector<16x16xf32>
    %187 = arith.addf %183, %186 : vector<16x16xf32>
    %188 = arith.addf %166, %180 : vector<16x16xf32>
    %189 = arith.addf %173, %187 : vector<16x16xf32>
    %c20 = arith.constant 20 : index
    %190 = memref.load %arg3[%c20] : memref<144xf32, #tpu.memory_space<smem>>
    %191 = vector.broadcast %190 : f32 to vector<16x16xf32>
    %192 = arith.mulf %191, %5 : vector<16x16xf32>
    %c56 = arith.constant 56 : index
    %193 = memref.load %arg3[%c56] : memref<144xf32, #tpu.memory_space<smem>>
    %194 = vector.broadcast %193 : f32 to vector<16x16xf32>
    %195 = arith.mulf %194, %13 : vector<16x16xf32>
    %196 = arith.addf %192, %195 : vector<16x16xf32>
    %c92 = arith.constant 92 : index
    %197 = memref.load %arg3[%c92] : memref<144xf32, #tpu.memory_space<smem>>
    %198 = vector.broadcast %197 : f32 to vector<16x16xf32>
    %199 = arith.mulf %198, %5 : vector<16x16xf32>
    %c128 = arith.constant 128 : index
    %200 = memref.load %arg3[%c128] : memref<144xf32, #tpu.memory_space<smem>>
    %201 = vector.broadcast %200 : f32 to vector<16x16xf32>
    %202 = arith.mulf %201, %13 : vector<16x16xf32>
    %203 = arith.addf %199, %202 : vector<16x16xf32>
    %204 = arith.addf %188, %196 : vector<16x16xf32>
    %205 = arith.addf %189, %203 : vector<16x16xf32>
    %c29 = arith.constant 29 : index
    %206 = memref.load %arg3[%c29] : memref<144xf32, #tpu.memory_space<smem>>
    %207 = vector.broadcast %206 : f32 to vector<16x16xf32>
    %208 = arith.mulf %207, %7 : vector<16x16xf32>
    %c65 = arith.constant 65 : index
    %209 = memref.load %arg3[%c65] : memref<144xf32, #tpu.memory_space<smem>>
    %210 = vector.broadcast %209 : f32 to vector<16x16xf32>
    %211 = arith.mulf %210, %15 : vector<16x16xf32>
    %212 = arith.addf %208, %211 : vector<16x16xf32>
    %c101 = arith.constant 101 : index
    %213 = memref.load %arg3[%c101] : memref<144xf32, #tpu.memory_space<smem>>
    %214 = vector.broadcast %213 : f32 to vector<16x16xf32>
    %215 = arith.mulf %214, %7 : vector<16x16xf32>
    %c137 = arith.constant 137 : index
    %216 = memref.load %arg3[%c137] : memref<144xf32, #tpu.memory_space<smem>>
    %217 = vector.broadcast %216 : f32 to vector<16x16xf32>
    %218 = arith.mulf %217, %15 : vector<16x16xf32>
    %219 = arith.addf %215, %218 : vector<16x16xf32>
    %220 = arith.addf %204, %212 : vector<16x16xf32>
    %221 = arith.addf %205, %219 : vector<16x16xf32>
    %c1_52 = arith.constant 1 : index
    %c0_53 = arith.constant 0 : index
    %222 = vector.load %arg8[%c1_52, %c0_53] : memref<16x16xf32, #tpu.memory_space<vmem>>, vector<15x15xf32>
    %223 = vector.extract_strided_slice %220 {offsets = [0, 1], sizes = [15, 15], strides = [1, 1]} : vector<16x16xf32> to vector<15x15xf32>
    %224 = arith.addf %222, %223 : vector<15x15xf32>
    %c1_54 = arith.constant 1 : index
    %c0_55 = arith.constant 0 : index
    %225 = vector.load %arg8[%c1_54, %c0_55] : memref<16x16xf32, #tpu.memory_space<vmem>>, vector<15x15xf32>
    tpu.vector_store %arg8[%c1_54, %c0_55], %224 {strides = array<i32>} : memref<16x16xf32, #tpu.memory_space<vmem>>, vector<15x15xf32>,
    %c1_56 = arith.constant 1 : index
    %c0_57 = arith.constant 0 : index
    %226 = vector.load %arg9[%c1_56, %c0_57] : memref<16x16xf32, #tpu.memory_space<vmem>>, vector<15x15xf32>
    %227 = vector.extract_strided_slice %221 {offsets = [0, 1], sizes = [15, 15], strides = [1, 1]} : vector<16x16xf32> to vector<15x15xf32>
    %228 = arith.addf %226, %227 : vector<15x15xf32>
    %c1_58 = arith.constant 1 : index
    %c0_59 = arith.constant 0 : index
    %229 = vector.load %arg9[%c1_58, %c0_59] : memref<16x16xf32, #tpu.memory_space<vmem>>, vector<15x15xf32>
    tpu.vector_store %arg9[%c1_58, %c0_59], %228 {strides = array<i32>} : memref<16x16xf32, #tpu.memory_space<vmem>>, vector<15x15xf32>,
    %c3_60 = arith.constant 3 : index
    %230 = memref.load %arg3[%c3_60] : memref<144xf32, #tpu.memory_space<smem>>
    %231 = vector.broadcast %230 : f32 to vector<16x16xf32>
    %232 = arith.mulf %231, %1 : vector<16x16xf32>
    %c39 = arith.constant 39 : index
    %233 = memref.load %arg3[%c39] : memref<144xf32, #tpu.memory_space<smem>>
    %234 = vector.broadcast %233 : f32 to vector<16x16xf32>
    %235 = arith.mulf %234, %9 : vector<16x16xf32>
    %236 = arith.addf %232, %235 : vector<16x16xf32>
    %c75 = arith.constant 75 : index
    %237 = memref.load %arg3[%c75] : memref<144xf32, #tpu.memory_space<smem>>
    %238 = vector.broadcast %237 : f32 to vector<16x16xf32>
    %239 = arith.mulf %238, %1 : vector<16x16xf32>
    %c111 = arith.constant 111 : index
    %240 = memref.load %arg3[%c111] : memref<144xf32, #tpu.memory_space<smem>>
    %241 = vector.broadcast %240 : f32 to vector<16x16xf32>
    %242 = arith.mulf %241, %9 : vector<16x16xf32>
    %243 = arith.addf %239, %242 : vector<16x16xf32>
    %c12 = arith.constant 12 : index
    %244 = memref.load %arg3[%c12] : memref<144xf32, #tpu.memory_space<smem>>
    %245 = vector.broadcast %244 : f32 to vector<16x16xf32>
    %246 = arith.mulf %245, %3 : vector<16x16xf32>
    %c48 = arith.constant 48 : index
    %247 = memref.load %arg3[%c48] : memref<144xf32, #tpu.memory_space<smem>>
    %248 = vector.broadcast %247 : f32 to vector<16x16xf32>
    %249 = arith.mulf %248, %11 : vector<16x16xf32>
    %250 = arith.addf %246, %249 : vector<16x16xf32>
    %c84 = arith.constant 84 : index
    %251 = memref.load %arg3[%c84] : memref<144xf32, #tpu.memory_space<smem>>
    %252 = vector.broadcast %251 : f32 to vector<16x16xf32>
    %253 = arith.mulf %252, %3 : vector<16x16xf32>
    %c120 = arith.constant 120 : index
    %254 = memref.load %arg3[%c120] : memref<144xf32, #tpu.memory_space<smem>>
    %255 = vector.broadcast %254 : f32 to vector<16x16xf32>
    %256 = arith.mulf %255, %11 : vector<16x16xf32>
    %257 = arith.addf %253, %256 : vector<16x16xf32>
    %258 = arith.addf %236, %250 : vector<16x16xf32>
    %259 = arith.addf %243, %257 : vector<16x16xf32>
    %c21 = arith.constant 21 : index
    %260 = memref.load %arg3[%c21] : memref<144xf32, #tpu.memory_space<smem>>
    %261 = vector.broadcast %260 : f32 to vector<16x16xf32>
    %262 = arith.mulf %261, %5 : vector<16x16xf32>
    %c57 = arith.constant 57 : index
    %263 = memref.load %arg3[%c57] : memref<144xf32, #tpu.memory_space<smem>>
    %264 = vector.broadcast %263 : f32 to vector<16x16xf32>
    %265 = arith.mulf %264, %13 : vector<16x16xf32>
    %266 = arith.addf %262, %265 : vector<16x16xf32>
    %c93 = arith.constant 93 : index
    %267 = memref.load %arg3[%c93] : memref<144xf32, #tpu.memory_space<smem>>
    %268 = vector.broadcast %267 : f32 to vector<16x16xf32>
    %269 = arith.mulf %268, %5 : vector<16x16xf32>
    %c129 = arith.constant 129 : index
    %270 = memref.load %arg3[%c129] : memref<144xf32, #tpu.memory_space<smem>>
    %271 = vector.broadcast %270 : f32 to vector<16x16xf32>
    %272 = arith.mulf %271, %13 : vector<16x16xf32>
    %273 = arith.addf %269, %272 : vector<16x16xf32>
    %274 = arith.addf %258, %266 : vector<16x16xf32>
    %275 = arith.addf %259, %273 : vector<16x16xf32>
    %c30 = arith.constant 30 : index
    %276 = memref.load %arg3[%c30] : memref<144xf32, #tpu.memory_space<smem>>
    %277 = vector.broadcast %276 : f32 to vector<16x16xf32>
    %278 = arith.mulf %277, %7 : vector<16x16xf32>
    %c66 = arith.constant 66 : index
    %279 = memref.load %arg3[%c66] : memref<144xf32, #tpu.memory_space<smem>>
    %280 = vector.broadcast %279 : f32 to vector<16x16xf32>
    %281 = arith.mulf %280, %15 : vector<16x16xf32>
    %282 = arith.addf %278, %281 : vector<16x16xf32>
    %c102 = arith.constant 102 : index
    %283 = memref.load %arg3[%c102] : memref<144xf32, #tpu.memory_space<smem>>
    %284 = vector.broadcast %283 : f32 to vector<16x16xf32>
    %285 = arith.mulf %284, %7 : vector<16x16xf32>
    %c138 = arith.constant 138 : index
    %286 = memref.load %arg3[%c138] : memref<144xf32, #tpu.memory_space<smem>>
    %287 = vector.broadcast %286 : f32 to vector<16x16xf32>
    %288 = arith.mulf %287, %15 : vector<16x16xf32>
    %289 = arith.addf %285, %288 : vector<16x16xf32>
    %290 = arith.addf %274, %282 : vector<16x16xf32>
    %291 = arith.addf %275, %289 : vector<16x16xf32>
    %c0_61 = arith.constant 0 : index
    %c1_62 = arith.constant 1 : index
    %292 = vector.load %arg8[%c0_61, %c1_62] : memref<16x16xf32, #tpu.memory_space<vmem>>, vector<16x15xf32>
    %293 = vector.extract_strided_slice %290 {offsets = [0, 0], sizes = [16, 15], strides = [1, 1]} : vector<16x16xf32> to vector<16x15xf32>
    %294 = arith.addf %292, %293 : vector<16x15xf32>
    %c0_63 = arith.constant 0 : index
    %c1_64 = arith.constant 1 : index
    %295 = vector.load %arg8[%c0_63, %c1_64] : memref<16x16xf32, #tpu.memory_space<vmem>>, vector<16x15xf32>
    tpu.vector_store %arg8[%c0_63, %c1_64], %294 {strides = array<i32>} : memref<16x16xf32, #tpu.memory_space<vmem>>, vector<16x15xf32>,
    %c0_65 = arith.constant 0 : index
    %c1_66 = arith.constant 1 : index
    %296 = vector.load %arg9[%c0_65, %c1_66] : memref<16x16xf32, #tpu.memory_space<vmem>>, vector<16x15xf32>
    %297 = vector.extract_strided_slice %291 {offsets = [0, 0], sizes = [16, 15], strides = [1, 1]} : vector<16x16xf32> to vector<16x15xf32>
    %298 = arith.addf %296, %297 : vector<16x15xf32>
    %c0_67 = arith.constant 0 : index
    %c1_68 = arith.constant 1 : index
    %299 = vector.load %arg9[%c0_67, %c1_68] : memref<16x16xf32, #tpu.memory_space<vmem>>, vector<16x15xf32>
    tpu.vector_store %arg9[%c0_67, %c1_68], %298 {strides = array<i32>} : memref<16x16xf32, #tpu.memory_space<vmem>>, vector<16x15xf32>,
    %c4 = arith.constant 4 : index
    %300 = memref.load %arg3[%c4] : memref<144xf32, #tpu.memory_space<smem>>
    %301 = vector.broadcast %300 : f32 to vector<16x16xf32>
    %302 = arith.mulf %301, %1 : vector<16x16xf32>
    %c40 = arith.constant 40 : index
    %303 = memref.load %arg3[%c40] : memref<144xf32, #tpu.memory_space<smem>>
    %304 = vector.broadcast %303 : f32 to vector<16x16xf32>
    %305 = arith.mulf %304, %9 : vector<16x16xf32>
    %306 = arith.addf %302, %305 : vector<16x16xf32>
    %c76 = arith.constant 76 : index
    %307 = memref.load %arg3[%c76] : memref<144xf32, #tpu.memory_space<smem>>
    %308 = vector.broadcast %307 : f32 to vector<16x16xf32>
    %309 = arith.mulf %308, %1 : vector<16x16xf32>
    %c112 = arith.constant 112 : index
    %310 = memref.load %arg3[%c112] : memref<144xf32, #tpu.memory_space<smem>>
    %311 = vector.broadcast %310 : f32 to vector<16x16xf32>
    %312 = arith.mulf %311, %9 : vector<16x16xf32>
    %313 = arith.addf %309, %312 : vector<16x16xf32>
    %c13 = arith.constant 13 : index
    %314 = memref.load %arg3[%c13] : memref<144xf32, #tpu.memory_space<smem>>
    %315 = vector.broadcast %314 : f32 to vector<16x16xf32>
    %316 = arith.mulf %315, %3 : vector<16x16xf32>
    %c49 = arith.constant 49 : index
    %317 = memref.load %arg3[%c49] : memref<144xf32, #tpu.memory_space<smem>>
    %318 = vector.broadcast %317 : f32 to vector<16x16xf32>
    %319 = arith.mulf %318, %11 : vector<16x16xf32>
    %320 = arith.addf %316, %319 : vector<16x16xf32>
    %c85 = arith.constant 85 : index
    %321 = memref.load %arg3[%c85] : memref<144xf32, #tpu.memory_space<smem>>
    %322 = vector.broadcast %321 : f32 to vector<16x16xf32>
    %323 = arith.mulf %322, %3 : vector<16x16xf32>
    %c121 = arith.constant 121 : index
    %324 = memref.load %arg3[%c121] : memref<144xf32, #tpu.memory_space<smem>>
    %325 = vector.broadcast %324 : f32 to vector<16x16xf32>
    %326 = arith.mulf %325, %11 : vector<16x16xf32>
    %327 = arith.addf %323, %326 : vector<16x16xf32>
    %328 = arith.addf %306, %320 : vector<16x16xf32>
    %329 = arith.addf %313, %327 : vector<16x16xf32>
    %c22 = arith.constant 22 : index
    %330 = memref.load %arg3[%c22] : memref<144xf32, #tpu.memory_space<smem>>
    %331 = vector.broadcast %330 : f32 to vector<16x16xf32>
    %332 = arith.mulf %331, %5 : vector<16x16xf32>
    %c58 = arith.constant 58 : index
    %333 = memref.load %arg3[%c58] : memref<144xf32, #tpu.memory_space<smem>>
    %334 = vector.broadcast %333 : f32 to vector<16x16xf32>
    %335 = arith.mulf %334, %13 : vector<16x16xf32>
    %336 = arith.addf %332, %335 : vector<16x16xf32>
    %c94 = arith.constant 94 : index
    %337 = memref.load %arg3[%c94] : memref<144xf32, #tpu.memory_space<smem>>
    %338 = vector.broadcast %337 : f32 to vector<16x16xf32>
    %339 = arith.mulf %338, %5 : vector<16x16xf32>
    %c130 = arith.constant 130 : index
    %340 = memref.load %arg3[%c130] : memref<144xf32, #tpu.memory_space<smem>>
    %341 = vector.broadcast %340 : f32 to vector<16x16xf32>
    %342 = arith.mulf %341, %13 : vector<16x16xf32>
    %343 = arith.addf %339, %342 : vector<16x16xf32>
    %344 = arith.addf %328, %336 : vector<16x16xf32>
    %345 = arith.addf %329, %343 : vector<16x16xf32>
    %c31 = arith.constant 31 : index
    %346 = memref.load %arg3[%c31] : memref<144xf32, #tpu.memory_space<smem>>
    %347 = vector.broadcast %346 : f32 to vector<16x16xf32>
    %348 = arith.mulf %347, %7 : vector<16x16xf32>
    %c67 = arith.constant 67 : index
    %349 = memref.load %arg3[%c67] : memref<144xf32, #tpu.memory_space<smem>>
    %350 = vector.broadcast %349 : f32 to vector<16x16xf32>
    %351 = arith.mulf %350, %15 : vector<16x16xf32>
    %352 = arith.addf %348, %351 : vector<16x16xf32>
    %c103 = arith.constant 103 : index
    %353 = memref.load %arg3[%c103] : memref<144xf32, #tpu.memory_space<smem>>
    %354 = vector.broadcast %353 : f32 to vector<16x16xf32>
    %355 = arith.mulf %354, %7 : vector<16x16xf32>
    %c139 = arith.constant 139 : index
    %356 = memref.load %arg3[%c139] : memref<144xf32, #tpu.memory_space<smem>>
    %357 = vector.broadcast %356 : f32 to vector<16x16xf32>
    %358 = arith.mulf %357, %15 : vector<16x16xf32>
    %359 = arith.addf %355, %358 : vector<16x16xf32>
    %360 = arith.addf %344, %352 : vector<16x16xf32>
    %361 = arith.addf %345, %359 : vector<16x16xf32>
    %c0_69 = arith.constant 0 : index
    %c0_70 = arith.constant 0 : index
    %362 = vector.load %arg8[%c0_69, %c0_70] : memref<16x16xf32, #tpu.memory_space<vmem>>, vector<16x16xf32>
    %363 = arith.addf %362, %360 : vector<16x16xf32>
    %c0_71 = arith.constant 0 : index
    %c0_72 = arith.constant 0 : index
    %364 = vector.load %arg8[%c0_71, %c0_72] : memref<16x16xf32, #tpu.memory_space<vmem>>, vector<16x16xf32>
    tpu.vector_store %arg8[%c0_71, %c0_72], %363 {strides = array<i32>} : memref<16x16xf32, #tpu.memory_space<vmem>>, vector<16x16xf32>,
    %c0_73 = arith.constant 0 : index
    %c0_74 = arith.constant 0 : index
    %365 = vector.load %arg9[%c0_73, %c0_74] : memref<16x16xf32, #tpu.memory_space<vmem>>, vector<16x16xf32>
    %366 = arith.addf %365, %361 : vector<16x16xf32>
    %c0_75 = arith.constant 0 : index
    %c0_76 = arith.constant 0 : index
    %367 = vector.load %arg9[%c0_75, %c0_76] : memref<16x16xf32, #tpu.memory_space<vmem>>, vector<16x16xf32>
    tpu.vector_store %arg9[%c0_75, %c0_76], %366 {strides = array<i32>} : memref<16x16xf32, #tpu.memory_space<vmem>>, vector<16x16xf32>,
    %c5 = arith.constant 5 : index
    %368 = memref.load %arg3[%c5] : memref<144xf32, #tpu.memory_space<smem>>
    %369 = vector.broadcast %368 : f32 to vector<16x16xf32>
    %370 = arith.mulf %369, %1 : vector<16x16xf32>
    %c41 = arith.constant 41 : index
    %371 = memref.load %arg3[%c41] : memref<144xf32, #tpu.memory_space<smem>>
    %372 = vector.broadcast %371 : f32 to vector<16x16xf32>
    %373 = arith.mulf %372, %9 : vector<16x16xf32>
    %374 = arith.addf %370, %373 : vector<16x16xf32>
    %c77 = arith.constant 77 : index
    %375 = memref.load %arg3[%c77] : memref<144xf32, #tpu.memory_space<smem>>
    %376 = vector.broadcast %375 : f32 to vector<16x16xf32>
    %377 = arith.mulf %376, %1 : vector<16x16xf32>
    %c113 = arith.constant 113 : index
    %378 = memref.load %arg3[%c113] : memref<144xf32, #tpu.memory_space<smem>>
    %379 = vector.broadcast %378 : f32 to vector<16x16xf32>
    %380 = arith.mulf %379, %9 : vector<16x16xf32>
    %381 = arith.addf %377, %380 : vector<16x16xf32>
    %c14 = arith.constant 14 : index
    %382 = memref.load %arg3[%c14] : memref<144xf32, #tpu.memory_space<smem>>
    %383 = vector.broadcast %382 : f32 to vector<16x16xf32>
    %384 = arith.mulf %383, %3 : vector<16x16xf32>
    %c50 = arith.constant 50 : index
    %385 = memref.load %arg3[%c50] : memref<144xf32, #tpu.memory_space<smem>>
    %386 = vector.broadcast %385 : f32 to vector<16x16xf32>
    %387 = arith.mulf %386, %11 : vector<16x16xf32>
    %388 = arith.addf %384, %387 : vector<16x16xf32>
    %c86 = arith.constant 86 : index
    %389 = memref.load %arg3[%c86] : memref<144xf32, #tpu.memory_space<smem>>
    %390 = vector.broadcast %389 : f32 to vector<16x16xf32>
    %391 = arith.mulf %390, %3 : vector<16x16xf32>
    %c122 = arith.constant 122 : index
    %392 = memref.load %arg3[%c122] : memref<144xf32, #tpu.memory_space<smem>>
    %393 = vector.broadcast %392 : f32 to vector<16x16xf32>
    %394 = arith.mulf %393, %11 : vector<16x16xf32>
    %395 = arith.addf %391, %394 : vector<16x16xf32>
    %396 = arith.addf %374, %388 : vector<16x16xf32>
    %397 = arith.addf %381, %395 : vector<16x16xf32>
    %c23 = arith.constant 23 : index
    %398 = memref.load %arg3[%c23] : memref<144xf32, #tpu.memory_space<smem>>
    %399 = vector.broadcast %398 : f32 to vector<16x16xf32>
    %400 = arith.mulf %399, %5 : vector<16x16xf32>
    %c59 = arith.constant 59 : index
    %401 = memref.load %arg3[%c59] : memref<144xf32, #tpu.memory_space<smem>>
    %402 = vector.broadcast %401 : f32 to vector<16x16xf32>
    %403 = arith.mulf %402, %13 : vector<16x16xf32>
    %404 = arith.addf %400, %403 : vector<16x16xf32>
    %c95 = arith.constant 95 : index
    %405 = memref.load %arg3[%c95] : memref<144xf32, #tpu.memory_space<smem>>
    %406 = vector.broadcast %405 : f32 to vector<16x16xf32>
    %407 = arith.mulf %406, %5 : vector<16x16xf32>
    %c131 = arith.constant 131 : index
    %408 = memref.load %arg3[%c131] : memref<144xf32, #tpu.memory_space<smem>>
    %409 = vector.broadcast %408 : f32 to vector<16x16xf32>
    %410 = arith.mulf %409, %13 : vector<16x16xf32>
    %411 = arith.addf %407, %410 : vector<16x16xf32>
    %412 = arith.addf %396, %404 : vector<16x16xf32>
    %413 = arith.addf %397, %411 : vector<16x16xf32>
    %c32 = arith.constant 32 : index
    %414 = memref.load %arg3[%c32] : memref<144xf32, #tpu.memory_space<smem>>
    %415 = vector.broadcast %414 : f32 to vector<16x16xf32>
    %416 = arith.mulf %415, %7 : vector<16x16xf32>
    %c68 = arith.constant 68 : index
    %417 = memref.load %arg3[%c68] : memref<144xf32, #tpu.memory_space<smem>>
    %418 = vector.broadcast %417 : f32 to vector<16x16xf32>
    %419 = arith.mulf %418, %15 : vector<16x16xf32>
    %420 = arith.addf %416, %419 : vector<16x16xf32>
    %c104 = arith.constant 104 : index
    %421 = memref.load %arg3[%c104] : memref<144xf32, #tpu.memory_space<smem>>
    %422 = vector.broadcast %421 : f32 to vector<16x16xf32>
    %423 = arith.mulf %422, %7 : vector<16x16xf32>
    %c140 = arith.constant 140 : index
    %424 = memref.load %arg3[%c140] : memref<144xf32, #tpu.memory_space<smem>>
    %425 = vector.broadcast %424 : f32 to vector<16x16xf32>
    %426 = arith.mulf %425, %15 : vector<16x16xf32>
    %427 = arith.addf %423, %426 : vector<16x16xf32>
    %428 = arith.addf %412, %420 : vector<16x16xf32>
    %429 = arith.addf %413, %427 : vector<16x16xf32>
    %c0_77 = arith.constant 0 : index
    %c0_78 = arith.constant 0 : index
    %430 = vector.load %arg8[%c0_77, %c0_78] : memref<16x16xf32, #tpu.memory_space<vmem>>, vector<16x15xf32>
    %431 = vector.extract_strided_slice %428 {offsets = [0, 1], sizes = [16, 15], strides = [1, 1]} : vector<16x16xf32> to vector<16x15xf32>
    %432 = arith.addf %430, %431 : vector<16x15xf32>
    %c0_79 = arith.constant 0 : index
    %c0_80 = arith.constant 0 : index
    %433 = vector.load %arg8[%c0_79, %c0_80] : memref<16x16xf32, #tpu.memory_space<vmem>>, vector<16x15xf32>
    tpu.vector_store %arg8[%c0_79, %c0_80], %432 {strides = array<i32>} : memref<16x16xf32, #tpu.memory_space<vmem>>, vector<16x15xf32>,
    %c0_81 = arith.constant 0 : index
    %c0_82 = arith.constant 0 : index
    %434 = vector.load %arg9[%c0_81, %c0_82] : memref<16x16xf32, #tpu.memory_space<vmem>>, vector<16x15xf32>
    %435 = vector.extract_strided_slice %429 {offsets = [0, 1], sizes = [16, 15], strides = [1, 1]} : vector<16x16xf32> to vector<16x15xf32>
    %436 = arith.addf %434, %435 : vector<16x15xf32>
    %c0_83 = arith.constant 0 : index
    %c0_84 = arith.constant 0 : index
    %437 = vector.load %arg9[%c0_83, %c0_84] : memref<16x16xf32, #tpu.memory_space<vmem>>, vector<16x15xf32>
    tpu.vector_store %arg9[%c0_83, %c0_84], %436 {strides = array<i32>} : memref<16x16xf32, #tpu.memory_space<vmem>>, vector<16x15xf32>,
    %c6 = arith.constant 6 : index
    %438 = memref.load %arg3[%c6] : memref<144xf32, #tpu.memory_space<smem>>
    %439 = vector.broadcast %438 : f32 to vector<16x16xf32>
    %440 = arith.mulf %439, %1 : vector<16x16xf32>
    %c42 = arith.constant 42 : index
    %441 = memref.load %arg3[%c42] : memref<144xf32, #tpu.memory_space<smem>>
    %442 = vector.broadcast %441 : f32 to vector<16x16xf32>
    %443 = arith.mulf %442, %9 : vector<16x16xf32>
    %444 = arith.addf %440, %443 : vector<16x16xf32>
    %c78 = arith.constant 78 : index
    %445 = memref.load %arg3[%c78] : memref<144xf32, #tpu.memory_space<smem>>
    %446 = vector.broadcast %445 : f32 to vector<16x16xf32>
    %447 = arith.mulf %446, %1 : vector<16x16xf32>
    %c114 = arith.constant 114 : index
    %448 = memref.load %arg3[%c114] : memref<144xf32, #tpu.memory_space<smem>>
    %449 = vector.broadcast %448 : f32 to vector<16x16xf32>
    %450 = arith.mulf %449, %9 : vector<16x16xf32>
    %451 = arith.addf %447, %450 : vector<16x16xf32>
    %c15 = arith.constant 15 : index
    %452 = memref.load %arg3[%c15] : memref<144xf32, #tpu.memory_space<smem>>
    %453 = vector.broadcast %452 : f32 to vector<16x16xf32>
    %454 = arith.mulf %453, %3 : vector<16x16xf32>
    %c51 = arith.constant 51 : index
    %455 = memref.load %arg3[%c51] : memref<144xf32, #tpu.memory_space<smem>>
    %456 = vector.broadcast %455 : f32 to vector<16x16xf32>
    %457 = arith.mulf %456, %11 : vector<16x16xf32>
    %458 = arith.addf %454, %457 : vector<16x16xf32>
    %c87 = arith.constant 87 : index
    %459 = memref.load %arg3[%c87] : memref<144xf32, #tpu.memory_space<smem>>
    %460 = vector.broadcast %459 : f32 to vector<16x16xf32>
    %461 = arith.mulf %460, %3 : vector<16x16xf32>
    %c123 = arith.constant 123 : index
    %462 = memref.load %arg3[%c123] : memref<144xf32, #tpu.memory_space<smem>>
    %463 = vector.broadcast %462 : f32 to vector<16x16xf32>
    %464 = arith.mulf %463, %11 : vector<16x16xf32>
    %465 = arith.addf %461, %464 : vector<16x16xf32>
    %466 = arith.addf %444, %458 : vector<16x16xf32>
    %467 = arith.addf %451, %465 : vector<16x16xf32>
    %c24 = arith.constant 24 : index
    %468 = memref.load %arg3[%c24] : memref<144xf32, #tpu.memory_space<smem>>
    %469 = vector.broadcast %468 : f32 to vector<16x16xf32>
    %470 = arith.mulf %469, %5 : vector<16x16xf32>
    %c60 = arith.constant 60 : index
    %471 = memref.load %arg3[%c60] : memref<144xf32, #tpu.memory_space<smem>>
    %472 = vector.broadcast %471 : f32 to vector<16x16xf32>
    %473 = arith.mulf %472, %13 : vector<16x16xf32>
    %474 = arith.addf %470, %473 : vector<16x16xf32>
    %c96 = arith.constant 96 : index
    %475 = memref.load %arg3[%c96] : memref<144xf32, #tpu.memory_space<smem>>
    %476 = vector.broadcast %475 : f32 to vector<16x16xf32>
    %477 = arith.mulf %476, %5 : vector<16x16xf32>
    %c132 = arith.constant 132 : index
    %478 = memref.load %arg3[%c132] : memref<144xf32, #tpu.memory_space<smem>>
    %479 = vector.broadcast %478 : f32 to vector<16x16xf32>
    %480 = arith.mulf %479, %13 : vector<16x16xf32>
    %481 = arith.addf %477, %480 : vector<16x16xf32>
    %482 = arith.addf %466, %474 : vector<16x16xf32>
    %483 = arith.addf %467, %481 : vector<16x16xf32>
    %c33 = arith.constant 33 : index
    %484 = memref.load %arg3[%c33] : memref<144xf32, #tpu.memory_space<smem>>
    %485 = vector.broadcast %484 : f32 to vector<16x16xf32>
    %486 = arith.mulf %485, %7 : vector<16x16xf32>
    %c69 = arith.constant 69 : index
    %487 = memref.load %arg3[%c69] : memref<144xf32, #tpu.memory_space<smem>>
    %488 = vector.broadcast %487 : f32 to vector<16x16xf32>
    %489 = arith.mulf %488, %15 : vector<16x16xf32>
    %490 = arith.addf %486, %489 : vector<16x16xf32>
    %c105 = arith.constant 105 : index
    %491 = memref.load %arg3[%c105] : memref<144xf32, #tpu.memory_space<smem>>
    %492 = vector.broadcast %491 : f32 to vector<16x16xf32>
    %493 = arith.mulf %492, %7 : vector<16x16xf32>
    %c141 = arith.constant 141 : index
    %494 = memref.load %arg3[%c141] : memref<144xf32, #tpu.memory_space<smem>>
    %495 = vector.broadcast %494 : f32 to vector<16x16xf32>
    %496 = arith.mulf %495, %15 : vector<16x16xf32>
    %497 = arith.addf %493, %496 : vector<16x16xf32>
    %498 = arith.addf %482, %490 : vector<16x16xf32>
    %499 = arith.addf %483, %497 : vector<16x16xf32>
    %c0_85 = arith.constant 0 : index
    %c1_86 = arith.constant 1 : index
    %500 = vector.load %arg8[%c0_85, %c1_86] : memref<16x16xf32, #tpu.memory_space<vmem>>, vector<15x15xf32>
    %501 = vector.extract_strided_slice %498 {offsets = [1, 0], sizes = [15, 15], strides = [1, 1]} : vector<16x16xf32> to vector<15x15xf32>
    %502 = arith.addf %500, %501 : vector<15x15xf32>
    %c0_87 = arith.constant 0 : index
    %c1_88 = arith.constant 1 : index
    %503 = vector.load %arg8[%c0_87, %c1_88] : memref<16x16xf32, #tpu.memory_space<vmem>>, vector<15x15xf32>
    tpu.vector_store %arg8[%c0_87, %c1_88], %502 {strides = array<i32>} : memref<16x16xf32, #tpu.memory_space<vmem>>, vector<15x15xf32>,
    %c0_89 = arith.constant 0 : index
    %c1_90 = arith.constant 1 : index
    %504 = vector.load %arg9[%c0_89, %c1_90] : memref<16x16xf32, #tpu.memory_space<vmem>>, vector<15x15xf32>
    %505 = vector.extract_strided_slice %499 {offsets = [1, 0], sizes = [15, 15], strides = [1, 1]} : vector<16x16xf32> to vector<15x15xf32>
    %506 = arith.addf %504, %505 : vector<15x15xf32>
    %c0_91 = arith.constant 0 : index
    %c1_92 = arith.constant 1 : index
    %507 = vector.load %arg9[%c0_91, %c1_92] : memref<16x16xf32, #tpu.memory_space<vmem>>, vector<15x15xf32>
    tpu.vector_store %arg9[%c0_91, %c1_92], %506 {strides = array<i32>} : memref<16x16xf32, #tpu.memory_space<vmem>>, vector<15x15xf32>,
    %c7 = arith.constant 7 : index
    %508 = memref.load %arg3[%c7] : memref<144xf32, #tpu.memory_space<smem>>
    %509 = vector.broadcast %508 : f32 to vector<16x16xf32>
    %510 = arith.mulf %509, %1 : vector<16x16xf32>
    %c43 = arith.constant 43 : index
    %511 = memref.load %arg3[%c43] : memref<144xf32, #tpu.memory_space<smem>>
    %512 = vector.broadcast %511 : f32 to vector<16x16xf32>
    %513 = arith.mulf %512, %9 : vector<16x16xf32>
    %514 = arith.addf %510, %513 : vector<16x16xf32>
    %c79 = arith.constant 79 : index
    %515 = memref.load %arg3[%c79] : memref<144xf32, #tpu.memory_space<smem>>
    %516 = vector.broadcast %515 : f32 to vector<16x16xf32>
    %517 = arith.mulf %516, %1 : vector<16x16xf32>
    %c115 = arith.constant 115 : index
    %518 = memref.load %arg3[%c115] : memref<144xf32, #tpu.memory_space<smem>>
    %519 = vector.broadcast %518 : f32 to vector<16x16xf32>
    %520 = arith.mulf %519, %9 : vector<16x16xf32>
    %521 = arith.addf %517, %520 : vector<16x16xf32>
    %c16 = arith.constant 16 : index
    %522 = memref.load %arg3[%c16] : memref<144xf32, #tpu.memory_space<smem>>
    %523 = vector.broadcast %522 : f32 to vector<16x16xf32>
    %524 = arith.mulf %523, %3 : vector<16x16xf32>
    %c52 = arith.constant 52 : index
    %525 = memref.load %arg3[%c52] : memref<144xf32, #tpu.memory_space<smem>>
    %526 = vector.broadcast %525 : f32 to vector<16x16xf32>
    %527 = arith.mulf %526, %11 : vector<16x16xf32>
    %528 = arith.addf %524, %527 : vector<16x16xf32>
    %c88 = arith.constant 88 : index
    %529 = memref.load %arg3[%c88] : memref<144xf32, #tpu.memory_space<smem>>
    %530 = vector.broadcast %529 : f32 to vector<16x16xf32>
    %531 = arith.mulf %530, %3 : vector<16x16xf32>
    %c124 = arith.constant 124 : index
    %532 = memref.load %arg3[%c124] : memref<144xf32, #tpu.memory_space<smem>>
    %533 = vector.broadcast %532 : f32 to vector<16x16xf32>
    %534 = arith.mulf %533, %11 : vector<16x16xf32>
    %535 = arith.addf %531, %534 : vector<16x16xf32>
    %536 = arith.addf %514, %528 : vector<16x16xf32>
    %537 = arith.addf %521, %535 : vector<16x16xf32>
    %c25 = arith.constant 25 : index
    %538 = memref.load %arg3[%c25] : memref<144xf32, #tpu.memory_space<smem>>
    %539 = vector.broadcast %538 : f32 to vector<16x16xf32>
    %540 = arith.mulf %539, %5 : vector<16x16xf32>
    %c61 = arith.constant 61 : index
    %541 = memref.load %arg3[%c61] : memref<144xf32, #tpu.memory_space<smem>>
    %542 = vector.broadcast %541 : f32 to vector<16x16xf32>
    %543 = arith.mulf %542, %13 : vector<16x16xf32>
    %544 = arith.addf %540, %543 : vector<16x16xf32>
    %c97 = arith.constant 97 : index
    %545 = memref.load %arg3[%c97] : memref<144xf32, #tpu.memory_space<smem>>
    %546 = vector.broadcast %545 : f32 to vector<16x16xf32>
    %547 = arith.mulf %546, %5 : vector<16x16xf32>
    %c133 = arith.constant 133 : index
    %548 = memref.load %arg3[%c133] : memref<144xf32, #tpu.memory_space<smem>>
    %549 = vector.broadcast %548 : f32 to vector<16x16xf32>
    %550 = arith.mulf %549, %13 : vector<16x16xf32>
    %551 = arith.addf %547, %550 : vector<16x16xf32>
    %552 = arith.addf %536, %544 : vector<16x16xf32>
    %553 = arith.addf %537, %551 : vector<16x16xf32>
    %c34 = arith.constant 34 : index
    %554 = memref.load %arg3[%c34] : memref<144xf32, #tpu.memory_space<smem>>
    %555 = vector.broadcast %554 : f32 to vector<16x16xf32>
    %556 = arith.mulf %555, %7 : vector<16x16xf32>
    %c70 = arith.constant 70 : index
    %557 = memref.load %arg3[%c70] : memref<144xf32, #tpu.memory_space<smem>>
    %558 = vector.broadcast %557 : f32 to vector<16x16xf32>
    %559 = arith.mulf %558, %15 : vector<16x16xf32>
    %560 = arith.addf %556, %559 : vector<16x16xf32>
    %c106 = arith.constant 106 : index
    %561 = memref.load %arg3[%c106] : memref<144xf32, #tpu.memory_space<smem>>
    %562 = vector.broadcast %561 : f32 to vector<16x16xf32>
    %563 = arith.mulf %562, %7 : vector<16x16xf32>
    %c142 = arith.constant 142 : index
    %564 = memref.load %arg3[%c142] : memref<144xf32, #tpu.memory_space<smem>>
    %565 = vector.broadcast %564 : f32 to vector<16x16xf32>
    %566 = arith.mulf %565, %15 : vector<16x16xf32>
    %567 = arith.addf %563, %566 : vector<16x16xf32>
    %568 = arith.addf %552, %560 : vector<16x16xf32>
    %569 = arith.addf %553, %567 : vector<16x16xf32>
    %c0_93 = arith.constant 0 : index
    %c0_94 = arith.constant 0 : index
    %570 = vector.load %arg8[%c0_93, %c0_94] : memref<16x16xf32, #tpu.memory_space<vmem>>, vector<15x16xf32>
    %571 = vector.extract_strided_slice %568 {offsets = [1, 0], sizes = [15, 16], strides = [1, 1]} : vector<16x16xf32> to vector<15x16xf32>
    %572 = arith.addf %570, %571 : vector<15x16xf32>
    %c0_95 = arith.constant 0 : index
    %c0_96 = arith.constant 0 : index
    %573 = vector.load %arg8[%c0_95, %c0_96] : memref<16x16xf32, #tpu.memory_space<vmem>>, vector<15x16xf32>
    tpu.vector_store %arg8[%c0_95, %c0_96], %572 {strides = array<i32>} : memref<16x16xf32, #tpu.memory_space<vmem>>, vector<15x16xf32>,
    %c0_97 = arith.constant 0 : index
    %c0_98 = arith.constant 0 : index
    %574 = vector.load %arg9[%c0_97, %c0_98] : memref<16x16xf32, #tpu.memory_space<vmem>>, vector<15x16xf32>
    %575 = vector.extract_strided_slice %569 {offsets = [1, 0], sizes = [15, 16], strides = [1, 1]} : vector<16x16xf32> to vector<15x16xf32>
    %576 = arith.addf %574, %575 : vector<15x16xf32>
    %c0_99 = arith.constant 0 : index
    %c0_100 = arith.constant 0 : index
    %577 = vector.load %arg9[%c0_99, %c0_100] : memref<16x16xf32, #tpu.memory_space<vmem>>, vector<15x16xf32>
    tpu.vector_store %arg9[%c0_99, %c0_100], %576 {strides = array<i32>} : memref<16x16xf32, #tpu.memory_space<vmem>>, vector<15x16xf32>,
    %c8 = arith.constant 8 : index
    %578 = memref.load %arg3[%c8] : memref<144xf32, #tpu.memory_space<smem>>
    %579 = vector.broadcast %578 : f32 to vector<16x16xf32>
    %580 = arith.mulf %579, %1 : vector<16x16xf32>
    %c44 = arith.constant 44 : index
    %581 = memref.load %arg3[%c44] : memref<144xf32, #tpu.memory_space<smem>>
    %582 = vector.broadcast %581 : f32 to vector<16x16xf32>
    %583 = arith.mulf %582, %9 : vector<16x16xf32>
    %584 = arith.addf %580, %583 : vector<16x16xf32>
    %c80 = arith.constant 80 : index
    %585 = memref.load %arg3[%c80] : memref<144xf32, #tpu.memory_space<smem>>
    %586 = vector.broadcast %585 : f32 to vector<16x16xf32>
    %587 = arith.mulf %586, %1 : vector<16x16xf32>
    %c116 = arith.constant 116 : index
    %588 = memref.load %arg3[%c116] : memref<144xf32, #tpu.memory_space<smem>>
    %589 = vector.broadcast %588 : f32 to vector<16x16xf32>
    %590 = arith.mulf %589, %9 : vector<16x16xf32>
    %591 = arith.addf %587, %590 : vector<16x16xf32>
    %c17 = arith.constant 17 : index
    %592 = memref.load %arg3[%c17] : memref<144xf32, #tpu.memory_space<smem>>
    %593 = vector.broadcast %592 : f32 to vector<16x16xf32>
    %594 = arith.mulf %593, %3 : vector<16x16xf32>
    %c53 = arith.constant 53 : index
    %595 = memref.load %arg3[%c53] : memref<144xf32, #tpu.memory_space<smem>>
    %596 = vector.broadcast %595 : f32 to vector<16x16xf32>
    %597 = arith.mulf %596, %11 : vector<16x16xf32>
    %598 = arith.addf %594, %597 : vector<16x16xf32>
    %c89 = arith.constant 89 : index
    %599 = memref.load %arg3[%c89] : memref<144xf32, #tpu.memory_space<smem>>
    %600 = vector.broadcast %599 : f32 to vector<16x16xf32>
    %601 = arith.mulf %600, %3 : vector<16x16xf32>
    %c125 = arith.constant 125 : index
    %602 = memref.load %arg3[%c125] : memref<144xf32, #tpu.memory_space<smem>>
    %603 = vector.broadcast %602 : f32 to vector<16x16xf32>
    %604 = arith.mulf %603, %11 : vector<16x16xf32>
    %605 = arith.addf %601, %604 : vector<16x16xf32>
    %606 = arith.addf %584, %598 : vector<16x16xf32>
    %607 = arith.addf %591, %605 : vector<16x16xf32>
    %c26 = arith.constant 26 : index
    %608 = memref.load %arg3[%c26] : memref<144xf32, #tpu.memory_space<smem>>
    %609 = vector.broadcast %608 : f32 to vector<16x16xf32>
    %610 = arith.mulf %609, %5 : vector<16x16xf32>
    %c62 = arith.constant 62 : index
    %611 = memref.load %arg3[%c62] : memref<144xf32, #tpu.memory_space<smem>>
    %612 = vector.broadcast %611 : f32 to vector<16x16xf32>
    %613 = arith.mulf %612, %13 : vector<16x16xf32>
    %614 = arith.addf %610, %613 : vector<16x16xf32>
    %c98 = arith.constant 98 : index
    %615 = memref.load %arg3[%c98] : memref<144xf32, #tpu.memory_space<smem>>
    %616 = vector.broadcast %615 : f32 to vector<16x16xf32>
    %617 = arith.mulf %616, %5 : vector<16x16xf32>
    %c134 = arith.constant 134 : index
    %618 = memref.load %arg3[%c134] : memref<144xf32, #tpu.memory_space<smem>>
    %619 = vector.broadcast %618 : f32 to vector<16x16xf32>
    %620 = arith.mulf %619, %13 : vector<16x16xf32>
    %621 = arith.addf %617, %620 : vector<16x16xf32>
    %622 = arith.addf %606, %614 : vector<16x16xf32>
    %623 = arith.addf %607, %621 : vector<16x16xf32>
    %c35 = arith.constant 35 : index
    %624 = memref.load %arg3[%c35] : memref<144xf32, #tpu.memory_space<smem>>
    %625 = vector.broadcast %624 : f32 to vector<16x16xf32>
    %626 = arith.mulf %625, %7 : vector<16x16xf32>
    %c71 = arith.constant 71 : index
    %627 = memref.load %arg3[%c71] : memref<144xf32, #tpu.memory_space<smem>>
    %628 = vector.broadcast %627 : f32 to vector<16x16xf32>
    %629 = arith.mulf %628, %15 : vector<16x16xf32>
    %630 = arith.addf %626, %629 : vector<16x16xf32>
    %c107 = arith.constant 107 : index
    %631 = memref.load %arg3[%c107] : memref<144xf32, #tpu.memory_space<smem>>
    %632 = vector.broadcast %631 : f32 to vector<16x16xf32>
    %633 = arith.mulf %632, %7 : vector<16x16xf32>
    %c143 = arith.constant 143 : index
    %634 = memref.load %arg3[%c143] : memref<144xf32, #tpu.memory_space<smem>>
    %635 = vector.broadcast %634 : f32 to vector<16x16xf32>
    %636 = arith.mulf %635, %15 : vector<16x16xf32>
    %637 = arith.addf %633, %636 : vector<16x16xf32>
    %638 = arith.addf %622, %630 : vector<16x16xf32>
    %639 = arith.addf %623, %637 : vector<16x16xf32>
    %c0_101 = arith.constant 0 : index
    %c0_102 = arith.constant 0 : index
    %640 = vector.load %arg8[%c0_101, %c0_102] : memref<16x16xf32, #tpu.memory_space<vmem>>, vector<15x15xf32>
    %641 = vector.extract_strided_slice %638 {offsets = [1, 1], sizes = [15, 15], strides = [1, 1]} : vector<16x16xf32> to vector<15x15xf32>
    %642 = arith.addf %640, %641 : vector<15x15xf32>
    %c0_103 = arith.constant 0 : index
    %c0_104 = arith.constant 0 : index
    %643 = vector.load %arg8[%c0_103, %c0_104] : memref<16x16xf32, #tpu.memory_space<vmem>>, vector<15x15xf32>
    tpu.vector_store %arg8[%c0_103, %c0_104], %642 {strides = array<i32>} : memref<16x16xf32, #tpu.memory_space<vmem>>, vector<15x15xf32>,
    %c0_105 = arith.constant 0 : index
    %c0_106 = arith.constant 0 : index
    %644 = vector.load %arg9[%c0_105, %c0_106] : memref<16x16xf32, #tpu.memory_space<vmem>>, vector<15x15xf32>
    %645 = vector.extract_strided_slice %639 {offsets = [1, 1], sizes = [15, 15], strides = [1, 1]} : vector<16x16xf32> to vector<15x15xf32>
    %646 = arith.addf %644, %645 : vector<15x15xf32>
    %c0_107 = arith.constant 0 : index
    %c0_108 = arith.constant 0 : index
    %647 = vector.load %arg9[%c0_107, %c0_108] : memref<16x16xf32, #tpu.memory_space<vmem>>, vector<15x15xf32>
    tpu.vector_store %arg9[%c0_107, %c0_108], %646 {strides = array<i32>} : memref<16x16xf32, #tpu.memory_space<vmem>>, vector<15x15xf32>,
    %c0_109 = arith.constant 0 : index
    %c0_110 = arith.constant 0 : index
    %648 = vector.load %arg8[%c0_109, %c0_110] : memref<16x16xf32, #tpu.memory_space<vmem>>, vector<16x16xf32>
    %c0_111 = arith.constant 0 : index
    %649 = memref.load %arg4[%c0_111] : memref<2xf32, #tpu.memory_space<smem>>
    %650 = vector.broadcast %649 : f32 to vector<16x16xf32>
    %651 = arith.addf %648, %650 : vector<16x16xf32>
    %652 = arith.negf %651 : vector<16x16xf32>
    %653 = math.exp %652 : vector<16x16xf32>
    %cst_112 = arith.constant 1.000000e+00 : f32
    %654 = vector.broadcast %cst_112 : f32 to vector<16x16xf32>
    %655 = arith.addf %654, %653 : vector<16x16xf32>
    %656 = arith.divf %654, %655 : vector<16x16xf32>
    %c0_113 = arith.constant 0 : index
    %c0_114 = arith.constant 0 : index
    %657 = vector.load %arg9[%c0_113, %c0_114] : memref<16x16xf32, #tpu.memory_space<vmem>>, vector<16x16xf32>
    %c1_115 = arith.constant 1 : index
    %658 = memref.load %arg4[%c1_115] : memref<2xf32, #tpu.memory_space<smem>>
    %659 = vector.broadcast %658 : f32 to vector<16x16xf32>
    %660 = arith.addf %657, %659 : vector<16x16xf32>
    %661 = arith.negf %660 : vector<16x16xf32>
    %662 = math.exp %661 : vector<16x16xf32>
    %cst_116 = arith.constant 1.000000e+00 : f32
    %663 = vector.broadcast %cst_116 : f32 to vector<16x16xf32>
    %664 = arith.addf %663, %662 : vector<16x16xf32>
    %665 = arith.divf %663, %664 : vector<16x16xf32>
    %666 = arith.mulf %656, %1 : vector<16x16xf32>
    %c0_117 = arith.constant 0 : index
    %667 = memref.load %arg5[%c0_117] : memref<4xf32, #tpu.memory_space<smem>>
    %668 = vector.broadcast %667 : f32 to vector<16x16xf32>
    %669 = arith.mulf %666, %668 : vector<16x16xf32>
    %670 = arith.mulf %665, %9 : vector<16x16xf32>
    %c0_118 = arith.constant 0 : index
    %671 = memref.load %arg6[%c0_118] : memref<4xf32, #tpu.memory_space<smem>>
    %672 = vector.broadcast %671 : f32 to vector<16x16xf32>
    %673 = arith.mulf %670, %672 : vector<16x16xf32>
    %674 = arith.addf %669, %673 : vector<16x16xf32>
    %c0_119 = arith.constant 0 : index
    %c0_120 = arith.constant 0 : index
    %c0_121 = arith.constant 0 : index
    %c0_122 = arith.constant 0 : index
    %675 = vector.load %arg7[%c0_119, %c0_120, %c0_121, %c0_122] : memref<1x4x16x16xf32, #tpu.memory_space<vmem>>, vector<1x1x16x16xf32>
    %676 = vector.shape_cast %675 : vector<1x1x16x16xf32> to vector<16x16xf32>
    %677 = vector.shape_cast %674 : vector<16x16xf32> to vector<1x1x16x16xf32>
    tpu.vector_store %arg7[%c0_119, %c0_120, %c0_121, %c0_122], %677 {strides = array<i32>} : memref<1x4x16x16xf32, #tpu.memory_space<vmem>>, vector<1x1x16x16xf32>,
    %678 = arith.mulf %656, %3 : vector<16x16xf32>
    %c1_123 = arith.constant 1 : index
    %679 = memref.load %arg5[%c1_123] : memref<4xf32, #tpu.memory_space<smem>>
    %680 = vector.broadcast %679 : f32 to vector<16x16xf32>
    %681 = arith.mulf %678, %680 : vector<16x16xf32>
    %682 = arith.mulf %665, %11 : vector<16x16xf32>
    %c1_124 = arith.constant 1 : index
    %683 = memref.load %arg6[%c1_124] : memref<4xf32, #tpu.memory_space<smem>>
    %684 = vector.broadcast %683 : f32 to vector<16x16xf32>
    %685 = arith.mulf %682, %684 : vector<16x16xf32>
    %686 = arith.addf %681, %685 : vector<16x16xf32>
    %c0_125 = arith.constant 0 : index
    %c1_126 = arith.constant 1 : index
    %c0_127 = arith.constant 0 : index
    %c0_128 = arith.constant 0 : index
    %687 = vector.load %arg7[%c0_125, %c1_126, %c0_127, %c0_128] : memref<1x4x16x16xf32, #tpu.memory_space<vmem>>, vector<1x1x16x16xf32>
    %688 = vector.shape_cast %687 : vector<1x1x16x16xf32> to vector<16x16xf32>
    %689 = vector.shape_cast %686 : vector<16x16xf32> to vector<1x1x16x16xf32>
    tpu.vector_store %arg7[%c0_125, %c1_126, %c0_127, %c0_128], %689 {strides = array<i32>} : memref<1x4x16x16xf32, #tpu.memory_space<vmem>>, vector<1x1x16x16xf32>,
    %690 = arith.mulf %656, %5 : vector<16x16xf32>
    %c2_129 = arith.constant 2 : index
    %691 = memref.load %arg5[%c2_129] : memref<4xf32, #tpu.memory_space<smem>>
    %692 = vector.broadcast %691 : f32 to vector<16x16xf32>
    %693 = arith.mulf %690, %692 : vector<16x16xf32>
    %694 = arith.mulf %665, %13 : vector<16x16xf32>
    %c2_130 = arith.constant 2 : index
    %695 = memref.load %arg6[%c2_130] : memref<4xf32, #tpu.memory_space<smem>>
    %696 = vector.broadcast %695 : f32 to vector<16x16xf32>
    %697 = arith.mulf %694, %696 : vector<16x16xf32>
    %698 = arith.addf %693, %697 : vector<16x16xf32>
    %c0_131 = arith.constant 0 : index
    %c2_132 = arith.constant 2 : index
    %c0_133 = arith.constant 0 : index
    %c0_134 = arith.constant 0 : index
    %699 = vector.load %arg7[%c0_131, %c2_132, %c0_133, %c0_134] : memref<1x4x16x16xf32, #tpu.memory_space<vmem>>, vector<1x1x16x16xf32>
    %700 = vector.shape_cast %699 : vector<1x1x16x16xf32> to vector<16x16xf32>
    %701 = vector.shape_cast %698 : vector<16x16xf32> to vector<1x1x16x16xf32>
    tpu.vector_store %arg7[%c0_131, %c2_132, %c0_133, %c0_134], %701 {strides = array<i32>} : memref<1x4x16x16xf32, #tpu.memory_space<vmem>>, vector<1x1x16x16xf32>,
    %702 = arith.mulf %656, %7 : vector<16x16xf32>
    %c3_135 = arith.constant 3 : index
    %703 = memref.load %arg5[%c3_135] : memref<4xf32, #tpu.memory_space<smem>>
    %704 = vector.broadcast %703 : f32 to vector<16x16xf32>
    %705 = arith.mulf %702, %704 : vector<16x16xf32>
    %706 = arith.mulf %665, %15 : vector<16x16xf32>
    %c3_136 = arith.constant 3 : index
    %707 = memref.load %arg6[%c3_136] : memref<4xf32, #tpu.memory_space<smem>>
    %708 = vector.broadcast %707 : f32 to vector<16x16xf32>
    %709 = arith.mulf %706, %708 : vector<16x16xf32>
    %710 = arith.addf %705, %709 : vector<16x16xf32>
    %c0_137 = arith.constant 0 : index
    %c3_138 = arith.constant 3 : index
    %c0_139 = arith.constant 0 : index
    %c0_140 = arith.constant 0 : index
    %711 = vector.load %arg7[%c0_137, %c3_138, %c0_139, %c0_140] : memref<1x4x16x16xf32, #tpu.memory_space<vmem>>, vector<1x1x16x16xf32>
    %712 = vector.shape_cast %711 : vector<1x1x16x16xf32> to vector<16x16xf32>
    %713 = vector.shape_cast %710 : vector<16x16xf32> to vector<1x1x16x16xf32>
    tpu.vector_store %arg7[%c0_137, %c3_138, %c0_139, %c0_140], %713 {strides = array<i32>} : memref<1x4x16x16xf32, #tpu.memory_space<vmem>>, vector<1x1x16x16xf32>,
    return
  }
  func.func @transform_0(%arg0: i32) -> (i32, i32, i32, i32) {
    %c0_i32 = arith.constant 0 : i32
    %c0_i32_0 = arith.constant 0 : i32
    %c0_i32_1 = arith.constant 0 : i32
    %c0_i32_2 = arith.constant 0 : i32
    return %arg0, %c0_i32, %c0_i32_0, %c0_i32_1 : i32, i32, i32, i32
  }
  func.func @transform_1(%arg0: i32) -> (i32, i32, i32, i32) {
    %c0_i32 = arith.constant 0 : i32
    %c0_i32_0 = arith.constant 0 : i32
    %c0_i32_1 = arith.constant 0 : i32
    %c0_i32_2 = arith.constant 0 : i32
    return %arg0, %c0_i32, %c0_i32_0, %c0_i32_1 : i32, i32, i32, i32
  }
  func.func @transform_2(%arg0: i32) -> i32 {
    %c0_i32 = arith.constant 0 : i32
    %c0_i32_0 = arith.constant 0 : i32
    return %c0_i32 : i32
  }
  func.func @transform_3(%arg0: i32) -> i32 {
    %c0_i32 = arith.constant 0 : i32
    %c0_i32_0 = arith.constant 0 : i32
    return %c0_i32 : i32
  }
  func.func @transform_4(%arg0: i32) -> i32 {
    %c0_i32 = arith.constant 0 : i32
    %c0_i32_0 = arith.constant 0 : i32
    return %c0_i32 : i32
  }
  func.func @transform_5(%arg0: i32) -> i32 {
    %c0_i32 = arith.constant 0 : i32
    %c0_i32_0 = arith.constant 0 : i32
    return %c0_i32 : i32
  }
  func.func @transform_6(%arg0: i32) -> (i32, i32, i32, i32) {
    %c0_i32 = arith.constant 0 : i32
    %c0_i32_0 = arith.constant 0 : i32
    %c0_i32_1 = arith.constant 0 : i32
    %c0_i32_2 = arith.constant 0 : i32
    return %arg0, %c0_i32, %c0_i32_0, %c0_i32_1 : i32, i32, i32, i32
  }
}

</mosaic_0001>

<llo_original>
// kernel: tpu_custom_call.1
$region0: #{tpu_custom_call.1}
  #allocation0 [shape = 'u32[]', space=smem, size = 0x4, offset = 0x4, fixed_abs, tag = 'smem constant byte address 0x4 - core index']
  #allocation1 [shape = 'u32[144,128]{1,0:T(1,128)}', space=vmem, size = 0x12000, scoped, tag = 'internal scratch']
  #allocation2 [shape = 'f32[16,16]{1,0:T(8,128)}', space=vmem, size = 0x2000, scoped, tag = 'scratch operand']
  #allocation3 [shape = 'f32[16,16]{1,0:T(8,128)}', space=vmem, size = 0x2000, scoped, tag = 'scratch operand']
  %s0 = inlined_call_operand.hbm [shape: f32[2,4,16,16], index: 0, kind: input, shape index: {}]
  %s1 = inlined_call_operand.hbm [shape: f32[2,4,16,16], index: 1, kind: input, shape index: {}]
  %s2 = inlined_call_operand.vmem [shape: f32[144], index: 2, kind: input, shape index: {}]
  %s3 = inlined_call_operand.vmem [shape: f32[2], index: 3, kind: input, shape index: {}]
  %s4 = inlined_call_operand.vmem [shape: f32[4], index: 4, kind: input, shape index: {}]
  %s5 = inlined_call_operand.vmem [shape: f32[4], index: 5, kind: input, shape index: {}]
  %s6 = inlined_call_operand.hbm [shape: f32[2,4,16,16], index: 6, kind: output, shape index: {}]
  %s7 = sld [smem:[#allocation0]]
  $region81: #{tpu_custom_call.1} parent=0
    _
  %s9 = ssub.s32 1, %s7
  %s10 = scalar_select 0, %s9, %s7
  $region1: #{tpu_custom_call.1} parent=0
    #allocation4 [shape = 'u8[65536]{0}', space=vmem, size = 0x10000, scoped, tag = 'input window, operand 0']
    #allocation5 [shape = 's32[2]{0}', space=sflag, size = 0x8, scoped, tag = 'scoped memory for tpu_custom_call.1']
    #allocation6 [shape = 's32[2]{0}', space=sflag, size = 0x8, scoped, tag = 'scoped memory for tpu_custom_call.1']
    #allocation7 [shape = 's32[2]{0}', space=sflag, size = 0x8, scoped, tag = 'scoped memory for tpu_custom_call.1']
    #allocation8 [shape = 'u8[65536]{0}', space=vmem, size = 0x10000, scoped, tag = 'input window, operand 1']
    #allocation9 [shape = 's32[2]{0}', space=sflag, size = 0x8, scoped, tag = 'scoped memory for tpu_custom_call.1']
    #allocation10 [shape = 'u8[1024]{0}', space=smem, size = 0x400, scoped, tag = 'input window, operand 2, single buffered']
    #allocation11 [shape = 'u8[512]{0}', space=smem, size = 0x200, scoped, tag = 'input window, operand 3, single buffered']
    #allocation12 [shape = 's32[1]{0}', space=sflag, size = 0x4, scoped, tag = 'scoped memory for tpu_custom_call.1']
    #allocation13 [shape = 'u8[512]{0}', space=smem, size = 0x200, scoped, tag = 'input window, operand 4, single buffered']
    #allocation14 [shape = 'u8[512]{0}', space=smem, size = 0x200, scoped, tag = 'input window, operand 5, single buffered']
    #allocation15 [shape = 's32[1]{0}', space=sflag, size = 0x4, scoped, tag = 'scoped memory for tpu_custom_call.1']
    #allocation16 [shape = 'u8[65536]{0}', space=vmem, size = 0x10000, scoped, tag = 'output window, operand 0']
    %11 = vsyncpa [#allocation5], 0
    %s12 = scalar_lea.sflag [#allocation5], 1
    %13 = vsyncpa %s12, 0
    %14 = vsyncpa [#allocation9], 0
    %s15 = scalar_lea.sflag [#allocation9], 1
    %16 = vsyncpa %s15, 0
    %17 = vsyncpa [#allocation7], 0
    %18 = vsyncpa [#allocation12], 0
    %19 = vsyncpa [#allocation15], 0
    %20 = vsyncpa [#allocation6], 0
    %s21 = scalar_lea.sflag [#allocation6], 1
    %22 = vsyncpa %s21, 0
    loop: start=0, step=1, limit=4
    $region2: #{tpu_custom_call.1} parent=1 // loop_pre_header
      _
    $region3: #{tpu_custom_call.1} parent=1 // loop_header
      %s24 = sphi 0, %s28
      %p25 = scmp.ge.s32.totalorder %s24, 4
      %s34 = sphi 0, %s36
      %s37 = sphi 0, %s34
      %s38 = sphi 0, %s37
      %s54 = sphi 0, %s38
      %s60 = sphi 0, %s62
      %s63 = sphi 0, %s60
      %s64 = sphi 0, %s63
      %s80 = sphi 0, %s64
      %s84 = sphi 0, %s84
      %s86 = sphi 0, %s84
      %s87 = sphi 0, %s86
      %s101 = sphi 0, %s87
      %s105 = sphi 0, %s105
      %s107 = sphi 0, %s105
      %s108 = sphi 0, %s107
      %s122 = sphi 0, %s108
      %s126 = sphi 0, %s126
      %s128 = sphi 0, %s126
      %s129 = sphi 0, %s128
      %s143 = sphi 0, %s129
      %s147 = sphi 0, %s147
      %s149 = sphi 0, %s147
      %s150 = sphi 0, %s149
      %s164 = sphi 0, %s150
      %s170 = sphi 0, %s172
      %s173 = sphi 0, %s170
      %s174 = sphi 0, %s173
      %s190 = sphi 0, %s174
    $region4: #{tpu_custom_call.1} parent=1 // loop_header_branch
      %27 = sbr.rel (%p25) target = $region8
    $region5: #{tpu_custom_call.1} parent=1 // loop_body
      %s29 = ssub.s32 %s24, 1
      %s30 = ssub.s32 %s24, 2
      %s31 = sadd.s32 %s24, 1
      %s32 = ssub.s32 %s24, %s31
      %p33 = scmp.eq.s32.totalorder %s32, 0
      %s35 = sadd.s32 %s34, 1
      %s36 = scalar_select %p33, %s34, %s35
      %p39 = pneg %p33
      %p40 = scmp.eq.s32.totalorder %s24, 1
      %p41 = por %p39, %p40
      %p42 = scmp.ne.s32.totalorder %s34, %s37
      %p43 = scmp.eq.s32.totalorder %s24, 0
      %p44 = por %p42, %p43
      %p45 = scmp.ne.s32.totalorder %s34, %s37
      %p46 = scmp.eq.s32.totalorder %s29, 1
      %p47 = por %p45, %p46
      %p48 = scmp.ne.s32.totalorder %s37, %s38
      %p49 = scmp.eq.s32.totalorder %s29, 0
      %p50 = por %p48, %p49
      %p51 = scmp.ne.s32.totalorder %s37, %s38
      %p52 = scmp.eq.s32.totalorder %s30, 1
      %p53 = por %p51, %p52
      %p55 = scmp.ne.s32.totalorder %s38, %s54
      %p56 = scmp.eq.s32.totalorder %s30, 0
      %p57 = por %p55, %p56
      %s58 = ssub.s32 %s24, %s31
      %p59 = scmp.eq.s32.totalorder %s58, 0
      %s61 = sadd.s32 %s60, 1
      %s62 = scalar_select %p59, %s60, %s61
      %p65 = pneg %p59
      %p66 = scmp.eq.s32.totalorder %s24, 1
      %p67 = por %p65, %p66
      %p68 = scmp.ne.s32.totalorder %s60, %s63
      %p69 = scmp.eq.s32.totalorder %s24, 0
      %p70 = por %p68, %p69
      %p71 = scmp.ne.s32.totalorder %s60, %s63
      %p72 = scmp.eq.s32.totalorder %s29, 1
      %p73 = por %p71, %p72
      %p74 = scmp.ne.s32.totalorder %s63, %s64
      %p75 = scmp.eq.s32.totalorder %s29, 0
      %p76 = por %p74, %p75
      %p77 = scmp.ne.s32.totalorder %s63, %s64
      %p78 = scmp.eq.s32.totalorder %s30, 1
      %p79 = por %p77, %p78
      %p81 = scmp.ne.s32.totalorder %s64, %s80
      %p82 = scmp.eq.s32.totalorder %s30, 0
      %p83 = por %p81, %p82
      %s85 = sadd.s32 %s84, 1
      %p88 = scmp.eq.s32.totalorder %s24, 1
      %p89 = scmp.ne.s32.totalorder %s84, %s86
      %p90 = scmp.eq.s32.totalorder %s24, 0
      %p91 = por %p89, %p90
      %p92 = scmp.ne.s32.totalorder %s84, %s86
      %p93 = scmp.eq.s32.totalorder %s29, 1
      %p94 = por %p92, %p93
      %p95 = scmp.ne.s32.totalorder %s86, %s87
      %p96 = scmp.eq.s32.totalorder %s29, 0
      %p97 = por %p95, %p96
      %p98 = scmp.ne.s32.totalorder %s86, %s87
      %p99 = scmp.eq.s32.totalorder %s30, 1
      %p100 = por %p98, %p99
      %p102 = scmp.ne.s32.totalorder %s87, %s101
      %p103 = scmp.eq.s32.totalorder %s30, 0
      %p104 = por %p102, %p103
      %s106 = sadd.s32 %s105, 1
      %p109 = scmp.eq.s32.totalorder %s24, 1
      %p110 = scmp.ne.s32.totalorder %s105, %s107
      %p111 = scmp.eq.s32.totalorder %s24, 0
      %p112 = por %p110, %p111
      %p113 = scmp.ne.s32.totalorder %s105, %s107
      %p114 = scmp.eq.s32.totalorder %s29, 1
      %p115 = por %p113, %p114
      %p116 = scmp.ne.s32.totalorder %s107, %s108
      %p117 = scmp.eq.s32.totalorder %s29, 0
      %p118 = por %p116, %p117
      %p119 = scmp.ne.s32.totalorder %s107, %s108
      %p120 = scmp.eq.s32.totalorder %s30, 1
      %p121 = por %p119, %p120
      %p123 = scmp.ne.s32.totalorder %s108, %s122
      %p124 = scmp.eq.s32.totalorder %s30, 0
      %p125 = por %p123, %p124
      %s127 = sadd.s32 %s126, 1
      %p130 = scmp.eq.s32.totalorder %s24, 1
      %p131 = scmp.ne.s32.totalorder %s126, %s128
      %p132 = scmp.eq.s32.totalorder %s24, 0
      %p133 = por %p131, %p132
      %p134 = scmp.ne.s32.totalorder %s126, %s128
      %p135 = scmp.eq.s32.totalorder %s29, 1
      %p136 = por %p134, %p135
      %p137 = scmp.ne.s32.totalorder %s128, %s129
      %p138 = scmp.eq.s32.totalorder %s29, 0
      %p139 = por %p137, %p138
      %p140 = scmp.ne.s32.totalorder %s128, %s129
      %p141 = scmp.eq.s32.totalorder %s30, 1
      %p142 = por %p140, %p141
      %p144 = scmp.ne.s32.totalorder %s129, %s143
      %p145 = scmp.eq.s32.totalorder %s30, 0
      %p146 = por %p144, %p145
      %s148 = sadd.s32 %s147, 1
      %p151 = scmp.eq.s32.totalorder %s24, 1
      %p152 = scmp.ne.s32.totalorder %s147, %s149
      %p153 = scmp.eq.s32.totalorder %s24, 0
      %p154 = por %p152, %p153
      %p155 = scmp.ne.s32.totalorder %s147, %s149
      %p156 = scmp.eq.s32.totalorder %s29, 1
      %p157 = por %p155, %p156
      %p158 = scmp.ne.s32.totalorder %s149, %s150
      %p159 = scmp.eq.s32.totalorder %s29, 0
      %p160 = por %p158, %p159
      %p161 = scmp.ne.s32.totalorder %s149, %s150
      %p162 = scmp.eq.s32.totalorder %s30, 1
      %p163 = por %p161, %p162
      %p165 = scmp.ne.s32.totalorder %s150, %s164
      %p166 = scmp.eq.s32.totalorder %s30, 0
      %p167 = por %p165, %p166
      %s168 = ssub.s32 %s24, %s31
      %p169 = scmp.eq.s32.totalorder %s168, 0
      %s171 = sadd.s32 %s170, 1
      %s172 = scalar_select %p169, %s170, %s171
      %p175 = pneg %p169
      %p176 = scmp.eq.s32.totalorder %s24, 1
      %p177 = por %p175, %p176
      %p178 = scmp.ne.s32.totalorder %s170, %s173
      %p179 = scmp.eq.s32.totalorder %s24, 0
      %p180 = por %p178, %p179
      %p181 = scmp.ne.s32.totalorder %s170, %s173
      %p182 = scmp.eq.s32.totalorder %s29, 1
      %p183 = por %p181, %p182
      %p184 = scmp.ne.s32.totalorder %s173, %s174
      %p185 = scmp.eq.s32.totalorder %s29, 0
      %p186 = por %p184, %p185
      %p187 = scmp.ne.s32.totalorder %s173, %s174
      %p188 = scmp.eq.s32.totalorder %s30, 1
      %p189 = por %p187, %p188
      %p191 = scmp.ne.s32.totalorder %s174, %s190
      %p192 = scmp.eq.s32.totalorder %s30, 0
      %p193 = por %p191, %p192
      %p194 = scmp.le.s32.totalorder 1, %s24
      %p195 = scmp.lt.s32.totalorder %s24, 3
      %p196 = pnand %p194, %p195
      %p197 = pneg %p196
      // Predicated region
      $region9: #{tpu_custom_call.1} parent=5 // pred_check
        _
      $region10: #{tpu_custom_call.1} parent=5 // pred_check_branch
        %199 = sbr.rel (%p196) target = $region12
      $region11: #{tpu_custom_call.1} parent=5 // pred_region
        %s200 = ssub.s32 %s24, 1
        // Predicated region
        $region13: #{tpu_custom_call.1} parent=11 // pred_check
          %p201 = pneg %p97
        $region14: #{tpu_custom_call.1} parent=11 // pred_check_branch
          %203 = sbr.rel (%p201) target = $region16
        $region15: #{tpu_custom_call.1} parent=11 // pred_region
          %s205 = ssub.s32 32, 32
          %206 = vsyncadd [#allocation7], %s205
          %s208 = sshll.u32 %s2, 4
          %s209 = int_to_ptr.vmem [resolvable:$true] %s208
          %211 = dma.vmem_to_smem %s209, 32, [#allocation10], [#allocation7]
        $region16: #{tpu_custom_call.1} parent=11 // pred_fallthru
          _
        // Predicated region
        $region17: #{tpu_custom_call.1} parent=11 // pred_check
          %p212 = pneg %p118
        $region18: #{tpu_custom_call.1} parent=11 // pred_check_branch
          %214 = sbr.rel (%p212) target = $region20
        $region19: #{tpu_custom_call.1} parent=11 // pred_region
          %s216 = ssub.s32 16, 16
          %217 = vsyncadd [#allocation12], %s216
          %s219 = sshll.u32 %s3, 4
          %s220 = int_to_ptr.vmem [resolvable:$true] %s219
          %222 = dma.vmem_to_smem %s220, 16, [#allocation11], [#allocation12]
        $region20: #{tpu_custom_call.1} parent=11 // pred_fallthru
          _
        // Predicated region
        $region21: #{tpu_custom_call.1} parent=11 // pred_check
          %p223 = pneg %p139
        $region22: #{tpu_custom_call.1} parent=11 // pred_check_branch
          %225 = sbr.rel (%p223) target = $region24
        $region23: #{tpu_custom_call.1} parent=11 // pred_region
          %s227 = ssub.s32 16, 16
          %228 = vsyncadd [#allocation12], %s227
          %s230 = sshll.u32 %s4, 4
          %s231 = int_to_ptr.vmem [resolvable:$true] %s230
          %233 = dma.vmem_to_smem %s231, 16, [#allocation13], [#allocation12]
        $region24: #{tpu_custom_call.1} parent=11 // pred_fallthru
          _
        // Predicated region
        $region25: #{tpu_custom_call.1} parent=11 // pred_check
          %p234 = pneg %p160
        $region26: #{tpu_custom_call.1} parent=11 // pred_check_branch
          %236 = sbr.rel (%p234) target = $region28
        $region27: #{tpu_custom_call.1} parent=11 // pred_region
          %s238 = ssub.s32 16, 16
          %239 = vsyncadd [#allocation15], %s238
          %s241 = sshll.u32 %s5, 4
          %s242 = int_to_ptr.vmem [resolvable:$true] %s241
          %244 = dma.vmem_to_smem %s242, 16, [#allocation14], [#allocation15]
        $region28: #{tpu_custom_call.1} parent=11 // pred_fallthru
          _
      $region12: #{tpu_custom_call.1} parent=5 // pred_fallthru
        _
      %p245 = scmp.lt.s32.totalorder %s24, 2
      // Predicated region
      $region29: #{tpu_custom_call.1} parent=5 // pred_check
        %p246 = pneg %p245
      $region30: #{tpu_custom_call.1} parent=5 // pred_check_branch
        %248 = sbr.rel (%p246) target = $region32
      $region31: #{tpu_custom_call.1} parent=5 // pred_region
        // Predicated region
        $region33: #{tpu_custom_call.1} parent=31 // pred_check
          %p249 = pneg %p44
        $region34: #{tpu_custom_call.1} parent=31 // pred_check_branch
          %251 = sbr.rel (%p249) target = $region36
        $region35: #{tpu_custom_call.1} parent=31 // pred_region
          %s252 = sand.u32 %s34, 1
          %s253 = scalar_lea.sflag [#allocation5], %s252
          %s254 = sand.u32 %s34, 1
          %s255 = smul.addr %s254, 64
          %s256 = scalar_lea.vmem [#allocation4], %s255
          %s258 = ssub.s32 1024, 1024
          %259 = vsyncadd %s253, %s258
          %s260 = smul.addr %s24, 8
          %s261 = smul.addr %s260, 128
          %s262 = scalar_lea.hbm %s0, %s261
          %s263 = sshll.u32 %s256, 4
          %s264 = int_to_ptr.vmem [resolvable:$true] %s263
          %269 = dma.hbm_to_vmem [thread:$0]  %s262, 1024, %s264, %s253, 128, 128, 8
        $region36: #{tpu_custom_call.1} parent=31 // pred_fallthru
          _
        // Predicated region
        $region37: #{tpu_custom_call.1} parent=31 // pred_check
          %p270 = pneg %p70
        $region38: #{tpu_custom_call.1} parent=31 // pred_check_branch
          %272 = sbr.rel (%p270) target = $region40
        $region39: #{tpu_custom_call.1} parent=31 // pred_region
          %s273 = sand.u32 %s60, 1
          %s274 = scalar_lea.sflag [#allocation9], %s273
          %s275 = sand.u32 %s60, 1
          %s276 = smul.addr %s275, 64
          %s277 = scalar_lea.vmem [#allocation8], %s276
          %s279 = ssub.s32 1024, 1024
          %280 = vsyncadd %s274, %s279
          %s281 = smul.addr %s24, 8
          %s282 = smul.addr %s281, 128
          %s283 = scalar_lea.hbm %s1, %s282
          %s284 = sshll.u32 %s277, 4
          %s285 = int_to_ptr.vmem [resolvable:$true] %s284
          %290 = dma.hbm_to_vmem [thread:$0]  %s283, 1024, %s285, %s274, 128, 128, 8
        $region40: #{tpu_custom_call.1} parent=31 // pred_fallthru
          _
      $region32: #{tpu_custom_call.1} parent=5 // pred_fallthru
        _
      %p291 = scmp.le.s32.totalorder 1, %s24
      %p292 = scmp.lt.s32.totalorder %s24, 3
      %p293 = pnand %p291, %p292
      %p294 = pneg %p293
      // Predicated region
      $region41: #{tpu_custom_call.1} parent=5 // pred_check
        _
      $region42: #{tpu_custom_call.1} parent=5 // pred_check_branch
        %296 = sbr.rel (%p293) target = $region44
      $region43: #{tpu_custom_call.1} parent=5 // pred_region
        %s297 = ssub.s32 %s24, 1
        %s298 = sand.u32 %s37, 1
        %s299 = scalar_lea.sflag [#allocation5], %s298
        %s300 = sand.u32 %s37, 1
        %s301 = smul.addr %s300, 64
        %s302 = scalar_lea.vmem [#allocation4], %s301
        // Predicated region
        $region45: #{tpu_custom_call.1} parent=43 // pred_check
          %p303 = pneg %p50
        $region46: #{tpu_custom_call.1} parent=43 // pred_check_branch
          %305 = sbr.rel (%p303) target = $region48
        $region47: #{tpu_custom_call.1} parent=43 // pred_region
          %306 = dma.done %s299, 1024
        $region48: #{tpu_custom_call.1} parent=43 // pred_fallthru
          _
        %s307 = sand.u32 %s63, 1
        %s308 = scalar_lea.sflag [#allocation9], %s307
        %s309 = sand.u32 %s63, 1
        %s310 = smul.addr %s309, 64
        %s311 = scalar_lea.vmem [#allocation8], %s310
        // Predicated region
        $region49: #{tpu_custom_call.1} parent=43 // pred_check
          %p312 = pneg %p76
        $region50: #{tpu_custom_call.1} parent=43 // pred_check_branch
          %314 = sbr.rel (%p312) target = $region52
        $region51: #{tpu_custom_call.1} parent=43 // pred_region
          %315 = dma.done %s308, 1024
        $region52: #{tpu_custom_call.1} parent=43 // pred_fallthru
          _
        // Predicated region
        $region53: #{tpu_custom_call.1} parent=43 // pred_check
          %p316 = pneg %p97
        $region54: #{tpu_custom_call.1} parent=43 // pred_check_branch
          %318 = sbr.rel (%p316) target = $region56
        $region55: #{tpu_custom_call.1} parent=43 // pred_region
          %319 = dma.done [#allocation7], 32
        $region56: #{tpu_custom_call.1} parent=43 // pred_fallthru
          _
        // Predicated region
        $region57: #{tpu_custom_call.1} parent=43 // pred_check
          %p320 = pneg %p118
        $region58: #{tpu_custom_call.1} parent=43 // pred_check_branch
          %322 = sbr.rel (%p320) target = $region60
        $region59: #{tpu_custom_call.1} parent=43 // pred_region
          %323 = dma.done [#allocation12], 16
        $region60: #{tpu_custom_call.1} parent=43 // pred_fallthru
          _
        // Predicated region
        $region61: #{tpu_custom_call.1} parent=43 // pred_check
          %p324 = pneg %p139
        $region62: #{tpu_custom_call.1} parent=43 // pred_check_branch
          %326 = sbr.rel (%p324) target = $region64
        $region63: #{tpu_custom_call.1} parent=43 // pred_region
          %327 = dma.done [#allocation12], 16
        $region64: #{tpu_custom_call.1} parent=43 // pred_fallthru
          _
        // Predicated region
        $region65: #{tpu_custom_call.1} parent=43 // pred_check
          %p328 = pneg %p160
        $region66: #{tpu_custom_call.1} parent=43 // pred_check_branch
          %330 = sbr.rel (%p328) target = $region68
        $region67: #{tpu_custom_call.1} parent=43 // pred_region
          %331 = dma.done [#allocation15], 16
        $region68: #{tpu_custom_call.1} parent=43 // pred_fallthru
          _
        %332 = sfence
        %s333 = sand.u32 %s37, 1
        %s334 = scalar_lea.sflag [#allocation5], %s333
        %s335 = sand.u32 %s37, 1
        %s336 = smul.addr %s335, 64
        %s337 = scalar_lea.vmem [#allocation4], %s336
        %p338 = pneg %p50
        %p339 = pneg %p47
        %s340 = sand.u32 %s63, 1
        %s341 = scalar_lea.sflag [#allocation9], %s340
        %s342 = sand.u32 %s63, 1
        %s343 = smul.addr %s342, 64
        %s344 = scalar_lea.vmem [#allocation8], %s343
        %p345 = pneg %p76
        %p346 = pneg %p73
        %p347 = pneg %p97
        %p348 = pneg %p94
        %p349 = pneg %p118
        %p350 = pneg %p115
        %p351 = pneg %p139
        %p352 = pneg %p136
        %p353 = pneg %p160
        %p354 = pneg %p157
        %p355 = pneg %p186
        %p356 = pneg %p183
        %s357 = sand.u32 %s173, 1
        %s358 = scalar_lea.sflag [#allocation6], %s357
        %s359 = sand.u32 %s173, 1
        %s360 = smul.addr %s359, 64
        %s361 = scalar_lea.vmem [#allocation16], %s360
        %v362 = vld [vmem:[%s302] sm:$0xff]
        %v363 = vld [vmem:[%s302 + $0x8] sm:$0xff]
        %s364 = scalar_lea.vmem %s302, 16 [#allocation4]
        %v365 = vld [vmem:[%s364] sm:$0xff]
        %v366 = vld [vmem:[%s364 + $0x8] sm:$0xff]
        %s367 = scalar_lea.vmem %s302, 32 [#allocation4]
        %v368 = vld [vmem:[%s367] sm:$0xff]
        %v369 = vld [vmem:[%s367 + $0x8] sm:$0xff]
        %s370 = scalar_lea.vmem %s302, 48 [#allocation4]
        %v371 = vld [vmem:[%s370] sm:$0xff]
        %v372 = vld [vmem:[%s370 + $0x8] sm:$0xff]
        %v373 = vld [vmem:[%s311] sm:$0xff]
        %v374 = vld [vmem:[%s311 + $0x8] sm:$0xff]
        %s375 = scalar_lea.vmem %s311, 16 [#allocation8]
        %v376 = vld [vmem:[%s375] sm:$0xff]
        %v377 = vld [vmem:[%s375 + $0x8] sm:$0xff]
        %s378 = scalar_lea.vmem %s311, 32 [#allocation8]
        %v379 = vld [vmem:[%s378] sm:$0xff]
        %v380 = vld [vmem:[%s378 + $0x8] sm:$0xff]
        %s381 = scalar_lea.vmem %s311, 48 [#allocation8]
        %v382 = vld [vmem:[%s381] sm:$0xff]
        %v383 = vld [vmem:[%s381 + $0x8] sm:$0xff]
        %vm384 = vcmask 130048
        %385 = vst.msk [vmem:[#allocation2] sm:$0xff] %vm384, 0.0
        %386 = vst.msk [vmem:[#allocation2 + $0x8] sm:$0xff] %vm384, 0.0
        %387 = vst.msk [vmem:[#allocation3] sm:$0xff] %vm384, 0.0
        %388 = vst.msk [vmem:[#allocation3 + $0x8] sm:$0xff] %vm384, 0.0
        %s389 = sld [smem:[#allocation10]]
        %v390 = vstv %s389
        %v391 = vmul.f32 %v390, %v362
        %v392 = vmul.f32 %v390, %v363
        %s393 = sld [smem:[#allocation10 + $0x24]]
        %v394 = vstv %s393
        %v395 = vmul.f32 %v394, %v373
        %v396 = vmul.f32 %v394, %v374
        %v397 = vadd.f32 %v391, %v395
        %v398 = vadd.f32 %v392, %v396
        %s399 = sld [smem:[#allocation10 + $0x48]]
        %v400 = vstv %s399
        %v401 = vmul.f32 %v400, %v362
        %v402 = vmul.f32 %v400, %v363
        %s403 = sld [smem:[#allocation10 + $0x6c]]
        %v404 = vstv %s403
        %v405 = vmul.f32 %v404, %v373
        %v406 = vmul.f32 %v404, %v374
        %v407 = vadd.f32 %v401, %v405
        %v408 = vadd.f32 %v402, %v406
        %s409 = sld [smem:[#allocation10 + $0x9]]
        %v410 = vstv %s409
        %v411 = vmul.f32 %v410, %v365
        %v412 = vmul.f32 %v410, %v366
        %s413 = sld [smem:[#allocation10 + $0x2d]]
        %v414 = vstv %s413
        %v415 = vmul.f32 %v414, %v376
        %v416 = vmul.f32 %v414, %v377
        %v417 = vadd.f32 %v411, %v415
        %v418 = vadd.f32 %v412, %v416
        %s419 = sld [smem:[#allocation10 + $0x51]]
        %v420 = vstv %s419
        %v421 = vmul.f32 %v420, %v365
        %v422 = vmul.f32 %v420, %v366
        %s423 = sld [smem:[#allocation10 + $0x75]]
        %v424 = vstv %s423
        %v425 = vmul.f32 %v424, %v376
        %v426 = vmul.f32 %v424, %v377
        %v427 = vadd.f32 %v421, %v425
        %v428 = vadd.f32 %v422, %v426
        %v429 = vadd.f32 %v397, %v417
        %v430 = vadd.f32 %v398, %v418
        %v431 = vadd.f32 %v407, %v427
        %v432 = vadd.f32 %v408, %v428
        %s433 = sld [smem:[#allocation10 + $0x12]]
        %v434 = vstv %s433
        %v435 = vmul.f32 %v434, %v368
        %v436 = vmul.f32 %v434, %v369
        %s437 = sld [smem:[#allocation10 + $0x36]]
        %v438 = vstv %s437
        %v439 = vmul.f32 %v438, %v379
        %v440 = vmul.f32 %v438, %v380
        %v441 = vadd.f32 %v435, %v439
        %v442 = vadd.f32 %v436, %v440
        %s443 = sld [smem:[#allocation10 + $0x5a]]
        %v444 = vstv %s443
        %v445 = vmul.f32 %v444, %v368
        %v446 = vmul.f32 %v444, %v369
        %s447 = sld [smem:[#allocation10 + $0x7e]]
        %v448 = vstv %s447
        %v449 = vmul.f32 %v448, %v379
        %v450 = vmul.f32 %v448, %v380
        %v451 = vadd.f32 %v445, %v449
        %v452 = vadd.f32 %v446, %v450
        %v453 = vadd.f32 %v429, %v441
        %v454 = vadd.f32 %v430, %v442
        %v455 = vadd.f32 %v431, %v451
        %v456 = vadd.f32 %v432, %v452
        %s457 = sld [smem:[#allocation10 + $0x1b]]
        %v458 = vstv %s457
        %v459 = vmul.f32 %v458, %v371
        %v460 = vmul.f32 %v458, %v372
        %s461 = sld [smem:[#allocation10 + $0x3f]]
        %v462 = vstv %s461
        %v463 = vmul.f32 %v462, %v382
        %v464 = vmul.f32 %v462, %v383
        %v465 = vadd.f32 %v459, %v463
        %v466 = vadd.f32 %v460, %v464
        %s467 = sld [smem:[#allocation10 + $0x63]]
        %v468 = vstv %s467
        %v469 = vmul.f32 %v468, %v371
        %v470 = vmul.f32 %v468, %v372
        %s471 = sld [smem:[#allocation10 + $0x87]]
        %v472 = vstv %s471
        %v473 = vmul.f32 %v472, %v382
        %v474 = vmul.f32 %v472, %v383
        %v475 = vadd.f32 %v469, %v473
        %v476 = vadd.f32 %v470, %v474
        %v477 = vadd.f32 %v453, %v465
        %v478 = vadd.f32 %v454, %v466
        %v479 = vadd.f32 %v455, %v475
        %v480 = vadd.f32 %v456, %v476
        %v481 = vld [vmem:[#allocation2 + $0x1] sm:$0xff]
        %v482 = vld [vmem:[#allocation2 + $0x9] sm:$0x7f]
        %485 = vrot.lane.b32.xlu0 %v477, 1
        %v486 = vpop.permute.xlu0 %485
        %487 = vrot.lane.b32.xlu0 %v478, 1
        %v488 = vpop.permute.xlu0 %487
        %v491 = vadd.f32 %v481, %v486
        %v492 = vadd.f32 %v482, %v488
        %vm493 = vcmask 130056
        %494 = vst.msk [vmem:[#allocation2 + $0x1] sm:$0xff] %vm493, %v491
        %vm495 = vcmask 129032
        %496 = vst.msk [vmem:[#allocation2 + $0x9] sm:$0x7f] %vm495, %v492
        %v497 = vld [vmem:[#allocation3 + $0x1] sm:$0xff]
        %v498 = vld [vmem:[#allocation3 + $0x9] sm:$0x7f]
        %501 = vrot.lane.b32.xlu0 %v479, 1
        %v502 = vpop.permute.xlu0 %501
        %503 = vrot.lane.b32.xlu0 %v480, 1
        %v504 = vpop.permute.xlu0 %503
        %v507 = vadd.f32 %v497, %v502
        %v508 = vadd.f32 %v498, %v504
        %509 = vst.msk [vmem:[#allocation3 + $0x1] sm:$0xff] %vm493, %v507
        %510 = vst.msk [vmem:[#allocation3 + $0x9] sm:$0x7f] %vm495, %v508
        %s511 = sld [smem:[#allocation10 + $0x1]]
        %v512 = vstv %s511
        %v513 = vmul.f32 %v512, %v362
        %v514 = vmul.f32 %v512, %v363
        %s515 = sld [smem:[#allocation10 + $0x25]]
        %v516 = vstv %s515
        %v517 = vmul.f32 %v516, %v373
        %v518 = vmul.f32 %v516, %v374
        %v519 = vadd.f32 %v513, %v517
        %v520 = vadd.f32 %v514, %v518
        %s521 = sld [smem:[#allocation10 + $0x49]]
        %v522 = vstv %s521
        %v523 = vmul.f32 %v522, %v362
        %v524 = vmul.f32 %v522, %v363
        %s525 = sld [smem:[#allocation10 + $0x6d]]
        %v526 = vstv %s525
        %v527 = vmul.f32 %v526, %v373
        %v528 = vmul.f32 %v526, %v374
        %v529 = vadd.f32 %v523, %v527
        %v530 = vadd.f32 %v524, %v528
        %s531 = sld [smem:[#allocation10 + $0xa]]
        %v532 = vstv %s531
        %v533 = vmul.f32 %v532, %v365
        %v534 = vmul.f32 %v532, %v366
        %s535 = sld [smem:[#allocation10 + $0x2e]]
        %v536 = vstv %s535
        %v537 = vmul.f32 %v536, %v376
        %v538 = vmul.f32 %v536, %v377
        %v539 = vadd.f32 %v533, %v537
        %v540 = vadd.f32 %v534, %v538
        %s541 = sld [smem:[#allocation10 + $0x52]]
        %v542 = vstv %s541
        %v543 = vmul.f32 %v542, %v365
        %v544 = vmul.f32 %v542, %v366
        %s545 = sld [smem:[#allocation10 + $0x76]]
        %v546 = vstv %s545
        %v547 = vmul.f32 %v546, %v376
        %v548 = vmul.f32 %v546, %v377
        %v549 = vadd.f32 %v543, %v547
        %v550 = vadd.f32 %v544, %v548
        %v551 = vadd.f32 %v519, %v539
        %v552 = vadd.f32 %v520, %v540
        %v553 = vadd.f32 %v529, %v549
        %v554 = vadd.f32 %v530, %v550
        %s555 = sld [smem:[#allocation10 + $0x13]]
        %v556 = vstv %s555
        %v557 = vmul.f32 %v556, %v368
        %v558 = vmul.f32 %v556, %v369
        %s559 = sld [smem:[#allocation10 + $0x37]]
        %v560 = vstv %s559
        %v561 = vmul.f32 %v560, %v379
        %v562 = vmul.f32 %v560, %v380
        %v563 = vadd.f32 %v557, %v561
        %v564 = vadd.f32 %v558, %v562
        %s565 = sld [smem:[#allocation10 + $0x5b]]
        %v566 = vstv %s565
        %v567 = vmul.f32 %v566, %v368
        %v568 = vmul.f32 %v566, %v369
        %s569 = sld [smem:[#allocation10 + $0x7f]]
        %v570 = vstv %s569
        %v571 = vmul.f32 %v570, %v379
        %v572 = vmul.f32 %v570, %v380
        %v573 = vadd.f32 %v567, %v571
        %v574 = vadd.f32 %v568, %v572
        %v575 = vadd.f32 %v551, %v563
        %v576 = vadd.f32 %v552, %v564
        %v577 = vadd.f32 %v553, %v573
        %v578 = vadd.f32 %v554, %v574
        %s579 = sld [smem:[#allocation10 + $0x1c]]
        %v580 = vstv %s579
        %v581 = vmul.f32 %v580, %v371
        %v582 = vmul.f32 %v580, %v372
        %s583 = sld [smem:[#allocation10 + $0x40]]
        %v584 = vstv %s583
        %v585 = vmul.f32 %v584, %v382
        %v586 = vmul.f32 %v584, %v383
        %v587 = vadd.f32 %v581, %v585
        %v588 = vadd.f32 %v582, %v586
        %s589 = sld [smem:[#allocation10 + $0x64]]
        %v590 = vstv %s589
        %v591 = vmul.f32 %v590, %v371
        %v592 = vmul.f32 %v590, %v372
        %s593 = sld [smem:[#allocation10 + $0x88]]
        %v594 = vstv %s593
        %v595 = vmul.f32 %v594, %v382
        %v596 = vmul.f32 %v594, %v383
        %v597 = vadd.f32 %v591, %v595
        %v598 = vadd.f32 %v592, %v596
        %v599 = vadd.f32 %v575, %v587
        %v600 = vadd.f32 %v576, %v588
        %v601 = vadd.f32 %v577, %v597
        %v602 = vadd.f32 %v578, %v598
        %v603 = vld [vmem:[#allocation2 + $0x1] sm:$0xff]
        %v604 = vld [vmem:[#allocation2 + $0x9] sm:$0x7f]
        %v605 = vadd.f32 %v603, %v599
        %v606 = vadd.f32 %v604, %v600
        %607 = vst.msk [vmem:[#allocation2 + $0x1] sm:$0xff] %vm384, %v605
        %vm608 = vcmask 129024
        %609 = vst.msk [vmem:[#allocation2 + $0x9] sm:$0x7f] %vm608, %v606
        %v610 = vld [vmem:[#allocation3 + $0x1] sm:$0xff]
        %v611 = vld [vmem:[#allocation3 + $0x9] sm:$0x7f]
        %v612 = vadd.f32 %v610, %v601
        %v613 = vadd.f32 %v611, %v602
        %614 = vst.msk [vmem:[#allocation3 + $0x1] sm:$0xff] %vm384, %v612
        %615 = vst.msk [vmem:[#allocation3 + $0x9] sm:$0x7f] %vm608, %v613
        %s616 = sld [smem:[#allocation10 + $0x2]]
        %v617 = vstv %s616
        %v618 = vmul.f32 %v617, %v362
        %v619 = vmul.f32 %v617, %v363
        %s620 = sld [smem:[#allocation10 + $0x26]]
        %v621 = vstv %s620
        %v622 = vmul.f32 %v621, %v373
        %v623 = vmul.f32 %v621, %v374
        %v624 = vadd.f32 %v618, %v622
        %v625 = vadd.f32 %v619, %v623
        %s626 = sld [smem:[#allocation10 + $0x4a]]
        %v627 = vstv %s626
        %v628 = vmul.f32 %v627, %v362
        %v629 = vmul.f32 %v627, %v363
        %s630 = sld [smem:[#allocation10 + $0x6e]]
        %v631 = vstv %s630
        %v632 = vmul.f32 %v631, %v373
        %v633 = vmul.f32 %v631, %v374
        %v634 = vadd.f32 %v628, %v632
        %v635 = vadd.f32 %v629, %v633
        %s636 = sld [smem:[#allocation10 + $0xb]]
        %v637 = vstv %s636
        %v638 = vmul.f32 %v637, %v365
        %v639 = vmul.f32 %v637, %v366
        %s640 = sld [smem:[#allocation10 + $0x2f]]
        %v641 = vstv %s640
        %v642 = vmul.f32 %v641, %v376
        %v643 = vmul.f32 %v641, %v377
        %v644 = vadd.f32 %v638, %v642
        %v645 = vadd.f32 %v639, %v643
        %s646 = sld [smem:[#allocation10 + $0x53]]
        %v647 = vstv %s646
        %v648 = vmul.f32 %v647, %v365
        %v649 = vmul.f32 %v647, %v366
        %s650 = sld [smem:[#allocation10 + $0x77]]
        %v651 = vstv %s650
        %v652 = vmul.f32 %v651, %v376
        %v653 = vmul.f32 %v651, %v377
        %v654 = vadd.f32 %v648, %v652
        %v655 = vadd.f32 %v649, %v653
        %v656 = vadd.f32 %v624, %v644
        %v657 = vadd.f32 %v625, %v645
        %v658 = vadd.f32 %v634, %v654
        %v659 = vadd.f32 %v635, %v655
        %s660 = sld [smem:[#allocation10 + $0x14]]
        %v661 = vstv %s660
        %v662 = vmul.f32 %v661, %v368
        %v663 = vmul.f32 %v661, %v369
        %s664 = sld [smem:[#allocation10 + $0x38]]
        %v665 = vstv %s664
        %v666 = vmul.f32 %v665, %v379
        %v667 = vmul.f32 %v665, %v380
        %v668 = vadd.f32 %v662, %v666
        %v669 = vadd.f32 %v663, %v667
        %s670 = sld [smem:[#allocation10 + $0x5c]]
        %v671 = vstv %s670
        %v672 = vmul.f32 %v671, %v368
        %v673 = vmul.f32 %v671, %v369
        %s674 = sld [smem:[#allocation10 + $0x80]]
        %v675 = vstv %s674
        %v676 = vmul.f32 %v675, %v379
        %v677 = vmul.f32 %v675, %v380
        %v678 = vadd.f32 %v672, %v676
        %v679 = vadd.f32 %v673, %v677
        %v680 = vadd.f32 %v656, %v668
        %v681 = vadd.f32 %v657, %v669
        %v682 = vadd.f32 %v658, %v678
        %v683 = vadd.f32 %v659, %v679
        %s684 = sld [smem:[#allocation10 + $0x1d]]
        %v685 = vstv %s684
        %v686 = vmul.f32 %v685, %v371
        %v687 = vmul.f32 %v685, %v372
        %s688 = sld [smem:[#allocation10 + $0x41]]
        %v689 = vstv %s688
        %v690 = vmul.f32 %v689, %v382
        %v691 = vmul.f32 %v689, %v383
        %v692 = vadd.f32 %v686, %v690
        %v693 = vadd.f32 %v687, %v691
        %s694 = sld [smem:[#allocation10 + $0x65]]
        %v695 = vstv %s694
        %v696 = vmul.f32 %v695, %v371
        %v697 = vmul.f32 %v695, %v372
        %s698 = sld [smem:[#allocation10 + $0x89]]
        %v699 = vstv %s698
        %v700 = vmul.f32 %v699, %v382
        %v701 = vmul.f32 %v699, %v383
        %v702 = vadd.f32 %v696, %v700
        %v703 = vadd.f32 %v697, %v701
        %v704 = vadd.f32 %v680, %v692
        %v705 = vadd.f32 %v681, %v693
        %v706 = vadd.f32 %v682, %v702
        %v707 = vadd.f32 %v683, %v703
        %v708 = vld [vmem:[#allocation2 + $0x1] sm:$0xff]
        %v709 = vld [vmem:[#allocation2 + $0x9] sm:$0x7f]
        %712 = vrot.lane.b32.xlu0 %v704, 127
        %v713 = vpop.permute.xlu0 %712
        %714 = vrot.lane.b32.xlu0 %v705, 127
        %v715 = vpop.permute.xlu0 %714
        %v718 = vadd.f32 %v708, %v713
        %v719 = vadd.f32 %v709, %v715
        %vm720 = vcmask 121856
        %721 = vst.msk [vmem:[#allocation2 + $0x1] sm:$0xff] %vm720, %v718
        %vm722 = vcmask 120832
        %723 = vst.msk [vmem:[#allocation2 + $0x9] sm:$0x7f] %vm722, %v719
        %v724 = vld [vmem:[#allocation3 + $0x1] sm:$0xff]
        %v725 = vld [vmem:[#allocation3 + $0x9] sm:$0x7f]
        %728 = vrot.lane.b32.xlu0 %v706, 127
        %v729 = vpop.permute.xlu0 %728
        %730 = vrot.lane.b32.xlu0 %v707, 127
        %v731 = vpop.permute.xlu0 %730
        %v734 = vadd.f32 %v724, %v729
        %v735 = vadd.f32 %v725, %v731
        %736 = vst.msk [vmem:[#allocation3 + $0x1] sm:$0xff] %vm720, %v734
        %737 = vst.msk [vmem:[#allocation3 + $0x9] sm:$0x7f] %vm722, %v735
        %s738 = sld [smem:[#allocation10 + $0x3]]
        %v739 = vstv %s738
        %v740 = vmul.f32 %v739, %v362
        %v741 = vmul.f32 %v739, %v363
        %s742 = sld [smem:[#allocation10 + $0x27]]
        %v743 = vstv %s742
        %v744 = vmul.f32 %v743, %v373
        %v745 = vmul.f32 %v743, %v374
        %v746 = vadd.f32 %v740, %v744
        %v747 = vadd.f32 %v741, %v745
        %s748 = sld [smem:[#allocation10 + $0x4b]]
        %v749 = vstv %s748
        %v750 = vmul.f32 %v749, %v362
        %v751 = vmul.f32 %v749, %v363
        %s752 = sld [smem:[#allocation10 + $0x6f]]
        %v753 = vstv %s752
        %v754 = vmul.f32 %v753, %v373
        %v755 = vmul.f32 %v753, %v374
        %v756 = vadd.f32 %v750, %v754
        %v757 = vadd.f32 %v751, %v755
        %s758 = sld [smem:[#allocation10 + $0xc]]
        %v759 = vstv %s758
        %v760 = vmul.f32 %v759, %v365
        %v761 = vmul.f32 %v759, %v366
        %s762 = sld [smem:[#allocation10 + $0x30]]
        %v763 = vstv %s762
        %v764 = vmul.f32 %v763, %v376
        %v765 = vmul.f32 %v763, %v377
        %v766 = vadd.f32 %v760, %v764
        %v767 = vadd.f32 %v761, %v765
        %s768 = sld [smem:[#allocation10 + $0x54]]
        %v769 = vstv %s768
        %v770 = vmul.f32 %v769, %v365
        %v771 = vmul.f32 %v769, %v366
        %s772 = sld [smem:[#allocation10 + $0x78]]
        %v773 = vstv %s772
        %v774 = vmul.f32 %v773, %v376
        %v775 = vmul.f32 %v773, %v377
        %v776 = vadd.f32 %v770, %v774
        %v777 = vadd.f32 %v771, %v775
        %v778 = vadd.f32 %v746, %v766
        %v779 = vadd.f32 %v747, %v767
        %v780 = vadd.f32 %v756, %v776
        %v781 = vadd.f32 %v757, %v777
        %s782 = sld [smem:[#allocation10 + $0x15]]
        %v783 = vstv %s782
        %v784 = vmul.f32 %v783, %v368
        %v785 = vmul.f32 %v783, %v369
        %s786 = sld [smem:[#allocation10 + $0x39]]
        %v787 = vstv %s786
        %v788 = vmul.f32 %v787, %v379
        %v789 = vmul.f32 %v787, %v380
        %v790 = vadd.f32 %v784, %v788
        %v791 = vadd.f32 %v785, %v789
        %s792 = sld [smem:[#allocation10 + $0x5d]]
        %v793 = vstv %s792
        %v794 = vmul.f32 %v793, %v368
        %v795 = vmul.f32 %v793, %v369
        %s796 = sld [smem:[#allocation10 + $0x81]]
        %v797 = vstv %s796
        %v798 = vmul.f32 %v797, %v379
        %v799 = vmul.f32 %v797, %v380
        %v800 = vadd.f32 %v794, %v798
        %v801 = vadd.f32 %v795, %v799
        %v802 = vadd.f32 %v778, %v790
        %v803 = vadd.f32 %v779, %v791
        %v804 = vadd.f32 %v780, %v800
        %v805 = vadd.f32 %v781, %v801
        %s806 = sld [smem:[#allocation10 + $0x1e]]
        %v807 = vstv %s806
        %v808 = vmul.f32 %v807, %v371
        %v809 = vmul.f32 %v807, %v372
        %s810 = sld [smem:[#allocation10 + $0x42]]
        %v811 = vstv %s810
        %v812 = vmul.f32 %v811, %v382
        %v813 = vmul.f32 %v811, %v383
        %v814 = vadd.f32 %v808, %v812
        %v815 = vadd.f32 %v809, %v813
        %s816 = sld [smem:[#allocation10 + $0x66]]
        %v817 = vstv %s816
        %v818 = vmul.f32 %v817, %v371
        %v819 = vmul.f32 %v817, %v372
        %s820 = sld [smem:[#allocation10 + $0x8a]]
        %v821 = vstv %s820
        %v822 = vmul.f32 %v821, %v382
        %v823 = vmul.f32 %v821, %v383
        %v824 = vadd.f32 %v818, %v822
        %v825 = vadd.f32 %v819, %v823
        %v826 = vadd.f32 %v802, %v814
        %v827 = vadd.f32 %v803, %v815
        %v828 = vadd.f32 %v804, %v824
        %v829 = vadd.f32 %v805, %v825
        %v830 = vld [vmem:[#allocation2] sm:$0xff]
        %v831 = vld [vmem:[#allocation2 + $0x8] sm:$0xff]
        %834 = vrot.lane.b32.xlu0 %v826, 1
        %v835 = vpop.permute.xlu0 %834
        %836 = vrot.lane.b32.xlu0 %v827, 1
        %v837 = vpop.permute.xlu0 %836
        %v840 = vadd.f32 %v830, %v835
        %v841 = vadd.f32 %v831, %v837
        %842 = vst.msk [vmem:[#allocation2] sm:$0xff] %vm493, %v840
        %843 = vst.msk [vmem:[#allocation2 + $0x8] sm:$0xff] %vm493, %v841
        %v844 = vld [vmem:[#allocation3] sm:$0xff]
        %v845 = vld [vmem:[#allocation3 + $0x8] sm:$0xff]
        %848 = vrot.lane.b32.xlu0 %v828, 1
        %v849 = vpop.permute.xlu0 %848
        %850 = vrot.lane.b32.xlu0 %v829, 1
        %v851 = vpop.permute.xlu0 %850
        %v854 = vadd.f32 %v844, %v849
        %v855 = vadd.f32 %v845, %v851
        %856 = vst.msk [vmem:[#allocation3] sm:$0xff] %vm493, %v854
        %857 = vst.msk [vmem:[#allocation3 + $0x8] sm:$0xff] %vm493, %v855
        %s858 = sld [smem:[#allocation10 + $0x4]]
        %v859 = vstv %s858
        %v860 = vmul.f32 %v859, %v362
        %v861 = vmul.f32 %v859, %v363
        %s862 = sld [smem:[#allocation10 + $0x28]]
        %v863 = vstv %s862
        %v864 = vmul.f32 %v863, %v373
        %v865 = vmul.f32 %v863, %v374
        %v866 = vadd.f32 %v860, %v864
        %v867 = vadd.f32 %v861, %v865
        %s868 = sld [smem:[#allocation10 + $0x4c]]
        %v869 = vstv %s868
        %v870 = vmul.f32 %v869, %v362
        %v871 = vmul.f32 %v869, %v363
        %s872 = sld [smem:[#allocation10 + $0x70]]
        %v873 = vstv %s872
        %v874 = vmul.f32 %v873, %v373
        %v875 = vmul.f32 %v873, %v374
        %v876 = vadd.f32 %v870, %v874
        %v877 = vadd.f32 %v871, %v875
        %s878 = sld [smem:[#allocation10 + $0xd]]
        %v879 = vstv %s878
        %v880 = vmul.f32 %v879, %v365
        %v881 = vmul.f32 %v879, %v366
        %s882 = sld [smem:[#allocation10 + $0x31]]
        %v883 = vstv %s882
        %v884 = vmul.f32 %v883, %v376
        %v885 = vmul.f32 %v883, %v377
        %v886 = vadd.f32 %v880, %v884
        %v887 = vadd.f32 %v881, %v885
        %s888 = sld [smem:[#allocation10 + $0x55]]
        %v889 = vstv %s888
        %v890 = vmul.f32 %v889, %v365
        %v891 = vmul.f32 %v889, %v366
        %s892 = sld [smem:[#allocation10 + $0x79]]
        %v893 = vstv %s892
        %v894 = vmul.f32 %v893, %v376
        %v895 = vmul.f32 %v893, %v377
        %v896 = vadd.f32 %v890, %v894
        %v897 = vadd.f32 %v891, %v895
        %v898 = vadd.f32 %v866, %v886
        %v899 = vadd.f32 %v867, %v887
        %v900 = vadd.f32 %v876, %v896
        %v901 = vadd.f32 %v877, %v897
        %s902 = sld [smem:[#allocation10 + $0x16]]
        %v903 = vstv %s902
        %v904 = vmul.f32 %v903, %v368
        %v905 = vmul.f32 %v903, %v369
        %s906 = sld [smem:[#allocation10 + $0x3a]]
        %v907 = vstv %s906
        %v908 = vmul.f32 %v907, %v379
        %v909 = vmul.f32 %v907, %v380
        %v910 = vadd.f32 %v904, %v908
        %v911 = vadd.f32 %v905, %v909
        %s912 = sld [smem:[#allocation10 + $0x5e]]
        %v913 = vstv %s912
        %v914 = vmul.f32 %v913, %v368
        %v915 = vmul.f32 %v913, %v369
        %s916 = sld [smem:[#allocation10 + $0x82]]
        %v917 = vstv %s916
        %v918 = vmul.f32 %v917, %v379
        %v919 = vmul.f32 %v917, %v380
        %v920 = vadd.f32 %v914, %v918
        %v921 = vadd.f32 %v915, %v919
        %v922 = vadd.f32 %v898, %v910
        %v923 = vadd.f32 %v899, %v911
        %v924 = vadd.f32 %v900, %v920
        %v925 = vadd.f32 %v901, %v921
        %s926 = sld [smem:[#allocation10 + $0x1f]]
        %v927 = vstv %s926
        %v928 = vmul.f32 %v927, %v371
        %v929 = vmul.f32 %v927, %v372
        %s930 = sld [smem:[#allocation10 + $0x43]]
        %v931 = vstv %s930
        %v932 = vmul.f32 %v931, %v382
        %v933 = vmul.f32 %v931, %v383
        %v934 = vadd.f32 %v928, %v932
        %v935 = vadd.f32 %v929, %v933
        %s936 = sld [smem:[#allocation10 + $0x67]]
        %v937 = vstv %s936
        %v938 = vmul.f32 %v937, %v371
        %v939 = vmul.f32 %v937, %v372
        %s940 = sld [smem:[#allocation10 + $0x8b]]
        %v941 = vstv %s940
        %v942 = vmul.f32 %v941, %v382
        %v943 = vmul.f32 %v941, %v383
        %v944 = vadd.f32 %v938, %v942
        %v945 = vadd.f32 %v939, %v943
        %v946 = vadd.f32 %v922, %v934
        %v947 = vadd.f32 %v923, %v935
        %v948 = vadd.f32 %v924, %v944
        %v949 = vadd.f32 %v925, %v945
        %v950 = vld [vmem:[#allocation2] sm:$0xff]
        %v951 = vld [vmem:[#allocation2 + $0x8] sm:$0xff]
        %v952 = vadd.f32 %v950, %v946
        %v953 = vadd.f32 %v951, %v947
        %954 = vst.msk [vmem:[#allocation2] sm:$0xff] %vm384, %v952
        %955 = vst.msk [vmem:[#allocation2 + $0x8] sm:$0xff] %vm384, %v953
        %v956 = vld [vmem:[#allocation3] sm:$0xff]
        %v957 = vld [vmem:[#allocation3 + $0x8] sm:$0xff]
        %v958 = vadd.f32 %v956, %v948
        %v959 = vadd.f32 %v957, %v949
        %960 = vst.msk [vmem:[#allocation3] sm:$0xff] %vm384, %v958
        %961 = vst.msk [vmem:[#allocation3 + $0x8] sm:$0xff] %vm384, %v959
        %s962 = sld [smem:[#allocation10 + $0x5]]
        %v963 = vstv %s962
        %v964 = vmul.f32 %v963, %v362
        %v965 = vmul.f32 %v963, %v363
        %s966 = sld [smem:[#allocation10 + $0x29]]
        %v967 = vstv %s966
        %v968 = vmul.f32 %v967, %v373
        %v969 = vmul.f32 %v967, %v374
        %v970 = vadd.f32 %v964, %v968
        %v971 = vadd.f32 %v965, %v969
        %s972 = sld [smem:[#allocation10 + $0x4d]]
        %v973 = vstv %s972
        %v974 = vmul.f32 %v973, %v362
        %v975 = vmul.f32 %v973, %v363
        %s976 = sld [smem:[#allocation10 + $0x71]]
        %v977 = vstv %s976
        %v978 = vmul.f32 %v977, %v373
        %v979 = vmul.f32 %v977, %v374
        %v980 = vadd.f32 %v974, %v978
        %v981 = vadd.f32 %v975, %v979
        %s982 = sld [smem:[#allocation10 + $0xe]]
        %v983 = vstv %s982
        %v984 = vmul.f32 %v983, %v365
        %v985 = vmul.f32 %v983, %v366
        %s986 = sld [smem:[#allocation10 + $0x32]]
        %v987 = vstv %s986
        %v988 = vmul.f32 %v987, %v376
        %v989 = vmul.f32 %v987, %v377
        %v990 = vadd.f32 %v984, %v988
        %v991 = vadd.f32 %v985, %v989
        %s992 = sld [smem:[#allocation10 + $0x56]]
        %v993 = vstv %s992
        %v994 = vmul.f32 %v993, %v365
        %v995 = vmul.f32 %v993, %v366
        %s996 = sld [smem:[#allocation10 + $0x7a]]
        %v997 = vstv %s996
        %v998 = vmul.f32 %v997, %v376
        %v999 = vmul.f32 %v997, %v377
        %v1000 = vadd.f32 %v994, %v998
        %v1001 = vadd.f32 %v995, %v999
        %v1002 = vadd.f32 %v970, %v990
        %v1003 = vadd.f32 %v971, %v991
        %v1004 = vadd.f32 %v980, %v1000
        %v1005 = vadd.f32 %v981, %v1001
        %s1006 = sld [smem:[#allocation10 + $0x17]]
        %v1007 = vstv %s1006
        %v1008 = vmul.f32 %v1007, %v368
        %v1009 = vmul.f32 %v1007, %v369
        %s1010 = sld [smem:[#allocation10 + $0x3b]]
        %v1011 = vstv %s1010
        %v1012 = vmul.f32 %v1011, %v379
        %v1013 = vmul.f32 %v1011, %v380
        %v1014 = vadd.f32 %v1008, %v1012
        %v1015 = vadd.f32 %v1009, %v1013
        %s1016 = sld [smem:[#allocation10 + $0x5f]]
        %v1017 = vstv %s1016
        %v1018 = vmul.f32 %v1017, %v368
        %v1019 = vmul.f32 %v1017, %v369
        %s1020 = sld [smem:[#allocation10 + $0x83]]
        %v1021 = vstv %s1020
        %v1022 = vmul.f32 %v1021, %v379
        %v1023 = vmul.f32 %v1021, %v380
        %v1024 = vadd.f32 %v1018, %v1022
        %v1025 = vadd.f32 %v1019, %v1023
        %v1026 = vadd.f32 %v1002, %v1014
        %v1027 = vadd.f32 %v1003, %v1015
        %v1028 = vadd.f32 %v1004, %v1024
        %v1029 = vadd.f32 %v1005, %v1025
        %s1030 = sld [smem:[#allocation10 + $0x20]]
        %v1031 = vstv %s1030
        %v1032 = vmul.f32 %v1031, %v371
        %v1033 = vmul.f32 %v1031, %v372
        %s1034 = sld [smem:[#allocation10 + $0x44]]
        %v1035 = vstv %s1034
        %v1036 = vmul.f32 %v1035, %v382
        %v1037 = vmul.f32 %v1035, %v383
        %v1038 = vadd.f32 %v1032, %v1036
        %v1039 = vadd.f32 %v1033, %v1037
        %s1040 = sld [smem:[#allocation10 + $0x68]]
        %v1041 = vstv %s1040
        %v1042 = vmul.f32 %v1041, %v371
        %v1043 = vmul.f32 %v1041, %v372
        %s1044 = sld [smem:[#allocation10 + $0x8c]]
        %v1045 = vstv %s1044
        %v1046 = vmul.f32 %v1045, %v382
        %v1047 = vmul.f32 %v1045, %v383
        %v1048 = vadd.f32 %v1042, %v1046
        %v1049 = vadd.f32 %v1043, %v1047
        %v1050 = vadd.f32 %v1026, %v1038
        %v1051 = vadd.f32 %v1027, %v1039
        %v1052 = vadd.f32 %v1028, %v1048
        %v1053 = vadd.f32 %v1029, %v1049
        %v1054 = vld [vmem:[#allocation2] sm:$0xff]
        %v1055 = vld [vmem:[#allocation2 + $0x8] sm:$0xff]
        %1058 = vrot.lane.b32.xlu0 %v1050, 127
        %v1059 = vpop.permute.xlu0 %1058
        %1060 = vrot.lane.b32.xlu0 %v1051, 127
        %v1061 = vpop.permute.xlu0 %1060
        %v1064 = vadd.f32 %v1054, %v1059
        %v1065 = vadd.f32 %v1055, %v1061
        %1066 = vst.msk [vmem:[#allocation2] sm:$0xff] %vm720, %v1064
        %1067 = vst.msk [vmem:[#allocation2 + $0x8] sm:$0xff] %vm720, %v1065
        %v1068 = vld [vmem:[#allocation3] sm:$0xff]
        %v1069 = vld [vmem:[#allocation3 + $0x8] sm:$0xff]
        %1072 = vrot.lane.b32.xlu0 %v1052, 127
        %v1073 = vpop.permute.xlu0 %1072
        %1074 = vrot.lane.b32.xlu0 %v1053, 127
        %v1075 = vpop.permute.xlu0 %1074
        %v1078 = vadd.f32 %v1068, %v1073
        %v1079 = vadd.f32 %v1069, %v1075
        %1080 = vst.msk [vmem:[#allocation3] sm:$0xff] %vm720, %v1078
        %1081 = vst.msk [vmem:[#allocation3 + $0x8] sm:$0xff] %vm720, %v1079
        %s1082 = sld [smem:[#allocation10 + $0x6]]
        %v1083 = vstv %s1082
        %v1084 = vmul.f32 %v1083, %v362
        %v1085 = vmul.f32 %v1083, %v363
        %s1086 = sld [smem:[#allocation10 + $0x2a]]
        %v1087 = vstv %s1086
        %v1088 = vmul.f32 %v1087, %v373
        %v1089 = vmul.f32 %v1087, %v374
        %v1090 = vadd.f32 %v1084, %v1088
        %v1091 = vadd.f32 %v1085, %v1089
        %s1092 = sld [smem:[#allocation10 + $0x4e]]
        %v1093 = vstv %s1092
        %v1094 = vmul.f32 %v1093, %v362
        %v1095 = vmul.f32 %v1093, %v363
        %s1096 = sld [smem:[#allocation10 + $0x72]]
        %v1097 = vstv %s1096
        %v1098 = vmul.f32 %v1097, %v373
        %v1099 = vmul.f32 %v1097, %v374
        %v1100 = vadd.f32 %v1094, %v1098
        %v1101 = vadd.f32 %v1095, %v1099
        %s1102 = sld [smem:[#allocation10 + $0xf]]
        %v1103 = vstv %s1102
        %v1104 = vmul.f32 %v1103, %v365
        %v1105 = vmul.f32 %v1103, %v366
        %s1106 = sld [smem:[#allocation10 + $0x33]]
        %v1107 = vstv %s1106
        %v1108 = vmul.f32 %v1107, %v376
        %v1109 = vmul.f32 %v1107, %v377
        %v1110 = vadd.f32 %v1104, %v1108
        %v1111 = vadd.f32 %v1105, %v1109
        %s1112 = sld [smem:[#allocation10 + $0x57]]
        %v1113 = vstv %s1112
        %v1114 = vmul.f32 %v1113, %v365
        %v1115 = vmul.f32 %v1113, %v366
        %s1116 = sld [smem:[#allocation10 + $0x7b]]
        %v1117 = vstv %s1116
        %v1118 = vmul.f32 %v1117, %v376
        %v1119 = vmul.f32 %v1117, %v377
        %v1120 = vadd.f32 %v1114, %v1118
        %v1121 = vadd.f32 %v1115, %v1119
        %v1122 = vadd.f32 %v1090, %v1110
        %v1123 = vadd.f32 %v1091, %v1111
        %v1124 = vadd.f32 %v1100, %v1120
        %v1125 = vadd.f32 %v1101, %v1121
        %s1126 = sld [smem:[#allocation10 + $0x18]]
        %v1127 = vstv %s1126
        %v1128 = vmul.f32 %v1127, %v368
        %v1129 = vmul.f32 %v1127, %v369
        %s1130 = sld [smem:[#allocation10 + $0x3c]]
        %v1131 = vstv %s1130
        %v1132 = vmul.f32 %v1131, %v379
        %v1133 = vmul.f32 %v1131, %v380
        %v1134 = vadd.f32 %v1128, %v1132
        %v1135 = vadd.f32 %v1129, %v1133
        %s1136 = sld [smem:[#allocation10 + $0x60]]
        %v1137 = vstv %s1136
        %v1138 = vmul.f32 %v1137, %v368
        %v1139 = vmul.f32 %v1137, %v369
        %s1140 = sld [smem:[#allocation10 + $0x84]]
        %v1141 = vstv %s1140
        %v1142 = vmul.f32 %v1141, %v379
        %v1143 = vmul.f32 %v1141, %v380
        %v1144 = vadd.f32 %v1138, %v1142
        %v1145 = vadd.f32 %v1139, %v1143
        %v1146 = vadd.f32 %v1122, %v1134
        %v1147 = vadd.f32 %v1123, %v1135
        %v1148 = vadd.f32 %v1124, %v1144
        %v1149 = vadd.f32 %v1125, %v1145
        %s1150 = sld [smem:[#allocation10 + $0x21]]
        %v1151 = vstv %s1150
        %v1152 = vmul.f32 %v1151, %v371
        %v1153 = vmul.f32 %v1151, %v372
        %s1154 = sld [smem:[#allocation10 + $0x45]]
        %v1155 = vstv %s1154
        %v1156 = vmul.f32 %v1155, %v382
        %v1157 = vmul.f32 %v1155, %v383
        %v1158 = vadd.f32 %v1152, %v1156
        %v1159 = vadd.f32 %v1153, %v1157
        %s1160 = sld [smem:[#allocation10 + $0x69]]
        %v1161 = vstv %s1160
        %v1162 = vmul.f32 %v1161, %v371
        %v1163 = vmul.f32 %v1161, %v372
        %s1164 = sld [smem:[#allocation10 + $0x8d]]
        %v1165 = vstv %s1164
        %v1166 = vmul.f32 %v1165, %v382
        %v1167 = vmul.f32 %v1165, %v383
        %v1168 = vadd.f32 %v1162, %v1166
        %v1169 = vadd.f32 %v1163, %v1167
        %v1170 = vadd.f32 %v1146, %v1158
        %v1171 = vadd.f32 %v1147, %v1159
        %v1172 = vadd.f32 %v1148, %v1168
        %v1173 = vadd.f32 %v1149, %v1169
        %v1174 = vld [vmem:[#allocation2] sm:$0xff]
        %v1175 = vld [vmem:[#allocation2 + $0x8] sm:$0x7f]
        %vm1178 = vcmask 1046528
        %v1179 = vrot.slane %v1170, 1
        %v1180 = vrot.slane %v1171, 1
        %v1181 = vsel %vm1178, %v1179, %v1180
        %1182 = vrot.lane.b32.xlu0 %v1181, 1
        %v1183 = vpop.permute.xlu0 %1182
        %1184 = vrot.lane.b32.xlu0 %v1180, 1
        %v1185 = vpop.permute.xlu0 %1184
        %v1188 = vadd.f32 %v1174, %v1183
        %v1189 = vadd.f32 %v1175, %v1185
        %1190 = vst.msk [vmem:[#allocation2] sm:$0xff] %vm493, %v1188
        %1191 = vst.msk [vmem:[#allocation2 + $0x8] sm:$0x7f] %vm495, %v1189
        %v1192 = vld [vmem:[#allocation3] sm:$0xff]
        %v1193 = vld [vmem:[#allocation3 + $0x8] sm:$0x7f]
        %v1196 = vrot.slane %v1172, 1
        %v1197 = vrot.slane %v1173, 1
        %v1198 = vsel %vm1178, %v1196, %v1197
        %1199 = vrot.lane.b32.xlu0 %v1198, 1
        %v1200 = vpop.permute.xlu0 %1199
        %1201 = vrot.lane.b32.xlu0 %v1197, 1
        %v1202 = vpop.permute.xlu0 %1201
        %v1205 = vadd.f32 %v1192, %v1200
        %v1206 = vadd.f32 %v1193, %v1202
        %1207 = vst.msk [vmem:[#allocation3] sm:$0xff] %vm493, %v1205
        %1208 = vst.msk [vmem:[#allocation3 + $0x8] sm:$0x7f] %vm495, %v1206
        %s1209 = sld [smem:[#allocation10 + $0x7]]
        %v1210 = vstv %s1209
        %v1211 = vmul.f32 %v1210, %v362
        %v1212 = vmul.f32 %v1210, %v363
        %s1213 = sld [smem:[#allocation10 + $0x2b]]
        %v1214 = vstv %s1213
        %v1215 = vmul.f32 %v1214, %v373
        %v1216 = vmul.f32 %v1214, %v374
        %v1217 = vadd.f32 %v1211, %v1215
        %v1218 = vadd.f32 %v1212, %v1216
        %s1219 = sld [smem:[#allocation10 + $0x4f]]
        %v1220 = vstv %s1219
        %v1221 = vmul.f32 %v1220, %v362
        %v1222 = vmul.f32 %v1220, %v363
        %s1223 = sld [smem:[#allocation10 + $0x73]]
        %v1224 = vstv %s1223
        %v1225 = vmul.f32 %v1224, %v373
        %v1226 = vmul.f32 %v1224, %v374
        %v1227 = vadd.f32 %v1221, %v1225
        %v1228 = vadd.f32 %v1222, %v1226
        %s1229 = sld [smem:[#allocation10 + $0x10]]
        %v1230 = vstv %s1229
        %v1231 = vmul.f32 %v1230, %v365
        %v1232 = vmul.f32 %v1230, %v366
        %s1233 = sld [smem:[#allocation10 + $0x34]]
        %v1234 = vstv %s1233
        %v1235 = vmul.f32 %v1234, %v376
        %v1236 = vmul.f32 %v1234, %v377
        %v1237 = vadd.f32 %v1231, %v1235
        %v1238 = vadd.f32 %v1232, %v1236
        %s1239 = sld [smem:[#allocation10 + $0x58]]
        %v1240 = vstv %s1239
        %v1241 = vmul.f32 %v1240, %v365
        %v1242 = vmul.f32 %v1240, %v366
        %s1243 = sld [smem:[#allocation10 + $0x7c]]
        %v1244 = vstv %s1243
        %v1245 = vmul.f32 %v1244, %v376
        %v1246 = vmul.f32 %v1244, %v377
        %v1247 = vadd.f32 %v1241, %v1245
        %v1248 = vadd.f32 %v1242, %v1246
        %v1249 = vadd.f32 %v1217, %v1237
        %v1250 = vadd.f32 %v1218, %v1238
        %v1251 = vadd.f32 %v1227, %v1247
        %v1252 = vadd.f32 %v1228, %v1248
        %s1253 = sld [smem:[#allocation10 + $0x19]]
        %v1254 = vstv %s1253
        %v1255 = vmul.f32 %v1254, %v368
        %v1256 = vmul.f32 %v1254, %v369
        %s1257 = sld [smem:[#allocation10 + $0x3d]]
        %v1258 = vstv %s1257
        %v1259 = vmul.f32 %v1258, %v379
        %v1260 = vmul.f32 %v1258, %v380
        %v1261 = vadd.f32 %v1255, %v1259
        %v1262 = vadd.f32 %v1256, %v1260
        %s1263 = sld [smem:[#allocation10 + $0x61]]
        %v1264 = vstv %s1263
        %v1265 = vmul.f32 %v1264, %v368
        %v1266 = vmul.f32 %v1264, %v369
        %s1267 = sld [smem:[#allocation10 + $0x85]]
        %v1268 = vstv %s1267
        %v1269 = vmul.f32 %v1268, %v379
        %v1270 = vmul.f32 %v1268, %v380
        %v1271 = vadd.f32 %v1265, %v1269
        %v1272 = vadd.f32 %v1266, %v1270
        %v1273 = vadd.f32 %v1249, %v1261
        %v1274 = vadd.f32 %v1250, %v1262
        %v1275 = vadd.f32 %v1251, %v1271
        %v1276 = vadd.f32 %v1252, %v1272
        %s1277 = sld [smem:[#allocation10 + $0x22]]
        %v1278 = vstv %s1277
        %v1279 = vmul.f32 %v1278, %v371
        %v1280 = vmul.f32 %v1278, %v372
        %s1281 = sld [smem:[#allocation10 + $0x46]]
        %v1282 = vstv %s1281
        %v1283 = vmul.f32 %v1282, %v382
        %v1284 = vmul.f32 %v1282, %v383
        %v1285 = vadd.f32 %v1279, %v1283
        %v1286 = vadd.f32 %v1280, %v1284
        %s1287 = sld [smem:[#allocation10 + $0x6a]]
        %v1288 = vstv %s1287
        %v1289 = vmul.f32 %v1288, %v371
        %v1290 = vmul.f32 %v1288, %v372
        %s1291 = sld [smem:[#allocation10 + $0x8e]]
        %v1292 = vstv %s1291
        %v1293 = vmul.f32 %v1292, %v382
        %v1294 = vmul.f32 %v1292, %v383
        %v1295 = vadd.f32 %v1289, %v1293
        %v1296 = vadd.f32 %v1290, %v1294
        %v1297 = vadd.f32 %v1273, %v1285
        %v1298 = vadd.f32 %v1274, %v1286
        %v1299 = vadd.f32 %v1275, %v1295
        %v1300 = vadd.f32 %v1276, %v1296
        %v1301 = vld [vmem:[#allocation2] sm:$0xff]
        %v1302 = vld [vmem:[#allocation2 + $0x8] sm:$0x7f]
        %v1305 = vrot.slane %v1297, 1
        %v1306 = vrot.slane %v1298, 1
        %v1307 = vsel %vm1178, %v1305, %v1306
        %v1310 = vadd.f32 %v1301, %v1307
        %v1311 = vadd.f32 %v1302, %v1306
        %1312 = vst.msk [vmem:[#allocation2] sm:$0xff] %vm384, %v1310
        %1313 = vst.msk [vmem:[#allocation2 + $0x8] sm:$0x7f] %vm608, %v1311
        %v1314 = vld [vmem:[#allocation3] sm:$0xff]
        %v1315 = vld [vmem:[#allocation3 + $0x8] sm:$0x7f]
        %v1318 = vrot.slane %v1299, 1
        %v1319 = vrot.slane %v1300, 1
        %v1320 = vsel %vm1178, %v1318, %v1319
        %v1323 = vadd.f32 %v1314, %v1320
        %v1324 = vadd.f32 %v1315, %v1319
        %1325 = vst.msk [vmem:[#allocation3] sm:$0xff] %vm384, %v1323
        %1326 = vst.msk [vmem:[#allocation3 + $0x8] sm:$0x7f] %vm608, %v1324
        %s1327 = sld [smem:[#allocation10 + $0x8]]
        %v1328 = vstv %s1327
        %v1329 = vmul.f32 %v1328, %v362
        %v1330 = vmul.f32 %v1328, %v363
        %s1331 = sld [smem:[#allocation10 + $0x2c]]
        %v1332 = vstv %s1331
        %v1333 = vmul.f32 %v1332, %v373
        %v1334 = vmul.f32 %v1332, %v374
        %v1335 = vadd.f32 %v1329, %v1333
        %v1336 = vadd.f32 %v1330, %v1334
        %s1337 = sld [smem:[#allocation10 + $0x50]]
        %v1338 = vstv %s1337
        %v1339 = vmul.f32 %v1338, %v362
        %v1340 = vmul.f32 %v1338, %v363
        %s1341 = sld [smem:[#allocation10 + $0x74]]
        %v1342 = vstv %s1341
        %v1343 = vmul.f32 %v1342, %v373
        %v1344 = vmul.f32 %v1342, %v374
        %v1345 = vadd.f32 %v1339, %v1343
        %v1346 = vadd.f32 %v1340, %v1344
        %s1347 = sld [smem:[#allocation10 + $0x11]]
        %v1348 = vstv %s1347
        %v1349 = vmul.f32 %v1348, %v365
        %v1350 = vmul.f32 %v1348, %v366
        %s1351 = sld [smem:[#allocation10 + $0x35]]
        %v1352 = vstv %s1351
        %v1353 = vmul.f32 %v1352, %v376
        %v1354 = vmul.f32 %v1352, %v377
        %v1355 = vadd.f32 %v1349, %v1353
        %v1356 = vadd.f32 %v1350, %v1354
        %s1357 = sld [smem:[#allocation10 + $0x59]]
        %v1358 = vstv %s1357
        %v1359 = vmul.f32 %v1358, %v365
        %v1360 = vmul.f32 %v1358, %v366
        %s1361 = sld [smem:[#allocation10 + $0x7d]]
        %v1362 = vstv %s1361
        %v1363 = vmul.f32 %v1362, %v376
        %v1364 = vmul.f32 %v1362, %v377
        %v1365 = vadd.f32 %v1359, %v1363
        %v1366 = vadd.f32 %v1360, %v1364
        %v1367 = vadd.f32 %v1335, %v1355
        %v1368 = vadd.f32 %v1336, %v1356
        %v1369 = vadd.f32 %v1345, %v1365
        %v1370 = vadd.f32 %v1346, %v1366
        %s1371 = sld [smem:[#allocation10 + $0x1a]]
        %v1372 = vstv %s1371
        %v1373 = vmul.f32 %v1372, %v368
        %v1374 = vmul.f32 %v1372, %v369
        %s1375 = sld [smem:[#allocation10 + $0x3e]]
        %v1376 = vstv %s1375
        %v1377 = vmul.f32 %v1376, %v379
        %v1378 = vmul.f32 %v1376, %v380
        %v1379 = vadd.f32 %v1373, %v1377
        %v1380 = vadd.f32 %v1374, %v1378
        %s1381 = sld [smem:[#allocation10 + $0x62]]
        %v1382 = vstv %s1381
        %v1383 = vmul.f32 %v1382, %v368
        %v1384 = vmul.f32 %v1382, %v369
        %s1385 = sld [smem:[#allocation10 + $0x86]]
        %v1386 = vstv %s1385
        %v1387 = vmul.f32 %v1386, %v379
        %v1388 = vmul.f32 %v1386, %v380
        %v1389 = vadd.f32 %v1383, %v1387
        %v1390 = vadd.f32 %v1384, %v1388
        %v1391 = vadd.f32 %v1367, %v1379
        %v1392 = vadd.f32 %v1368, %v1380
        %v1393 = vadd.f32 %v1369, %v1389
        %v1394 = vadd.f32 %v1370, %v1390
        %s1395 = sld [smem:[#allocation10 + $0x23]]
        %v1396 = vstv %s1395
        %v1397 = vmul.f32 %v1396, %v371
        %v1398 = vmul.f32 %v1396, %v372
        %s1399 = sld [smem:[#allocation10 + $0x47]]
        %v1400 = vstv %s1399
        %v1401 = vmul.f32 %v1400, %v382
        %v1402 = vmul.f32 %v1400, %v383
        %v1403 = vadd.f32 %v1397, %v1401
        %v1404 = vadd.f32 %v1398, %v1402
        %s1405 = sld [smem:[#allocation10 + $0x6b]]
        %v1406 = vstv %s1405
        %v1407 = vmul.f32 %v1406, %v371
        %v1408 = vmul.f32 %v1406, %v372
        %s1409 = sld [smem:[#allocation10 + $0x8f]]
        %v1410 = vstv %s1409
        %v1411 = vmul.f32 %v1410, %v382
        %v1412 = vmul.f32 %v1410, %v383
        %v1413 = vadd.f32 %v1407, %v1411
        %v1414 = vadd.f32 %v1408, %v1412
        %v1415 = vadd.f32 %v1391, %v1403
        %v1416 = vadd.f32 %v1392, %v1404
        %v1417 = vadd.f32 %v1393, %v1413
        %v1418 = vadd.f32 %v1394, %v1414
        %v1419 = vld [vmem:[#allocation2] sm:$0xff]
        %v1420 = vld [vmem:[#allocation2 + $0x8] sm:$0x7f]
        %v1423 = vrot.slane %v1415, 1
        %v1424 = vrot.slane %v1416, 1
        %v1425 = vsel %vm1178, %v1423, %v1424
        %1426 = vrot.lane.b32.xlu0 %v1425, 127
        %v1427 = vpop.permute.xlu0 %1426
        %1428 = vrot.lane.b32.xlu0 %v1424, 127
        %v1429 = vpop.permute.xlu0 %1428
        %v1432 = vadd.f32 %v1419, %v1427
        %v1433 = vadd.f32 %v1420, %v1429
        %1434 = vst.msk [vmem:[#allocation2] sm:$0xff] %vm720, %v1432
        %1435 = vst.msk [vmem:[#allocation2 + $0x8] sm:$0x7f] %vm722, %v1433
        %v1436 = vld [vmem:[#allocation3] sm:$0xff]
        %v1437 = vld [vmem:[#allocation3 + $0x8] sm:$0x7f]
        %v1440 = vrot.slane %v1417, 1
        %v1441 = vrot.slane %v1418, 1
        %v1442 = vsel %vm1178, %v1440, %v1441
        %1443 = vrot.lane.b32.xlu0 %v1442, 127
        %v1444 = vpop.permute.xlu0 %1443
        %1445 = vrot.lane.b32.xlu0 %v1441, 127
        %v1446 = vpop.permute.xlu0 %1445
        %v1449 = vadd.f32 %v1436, %v1444
        %v1450 = vadd.f32 %v1437, %v1446
        %1451 = vst.msk [vmem:[#allocation3] sm:$0xff] %vm720, %v1449
        %1452 = vst.msk [vmem:[#allocation3 + $0x8] sm:$0x7f] %vm722, %v1450
        %v1453 = vld [vmem:[#allocation2] sm:$0xff]
        %v1454 = vld [vmem:[#allocation2 + $0x8] sm:$0xff]
        %s1455 = sld [smem:[#allocation11]]
        %v1456 = vstv %s1455
        %v1457 = vadd.f32 %v1453, %v1456
        %v1458 = vadd.f32 %v1454, %v1456
        %v1459 = vxor.u32 %v1457, 2147483648
        %v1460 = vxor.u32 %v1458, 2147483648
        %v1461 = vmul.f32 %v1459, 1.442695
        %v1462 = vpow.pop %v1461
        %v1463 = vmul.f32 %v1460, 1.442695
        %v1464 = vpow.pop %v1463
        %v1465 = vadd.f32 %v1462, 1.0
        %v1466 = vadd.f32 %v1464, 1.0
        %v1467 = vrcp.pop %v1465
        %v1468 = vmul.f32 1.0, %v1467
        %v1469 = vrcp.pop %v1466
        %v1470 = vmul.f32 1.0, %v1469
        %v1471 = vld [vmem:[#allocation3] sm:$0xff]
        %v1472 = vld [vmem:[#allocation3 + $0x8] sm:$0xff]
        %s1473 = sld [smem:[#allocation11 + $0x1]]
        %v1474 = vstv %s1473
        %v1475 = vadd.f32 %v1471, %v1474
        %v1476 = vadd.f32 %v1472, %v1474
        %v1477 = vxor.u32 %v1475, 2147483648
        %v1478 = vxor.u32 %v1476, 2147483648
        %v1479 = vmul.f32 %v1477, 1.442695
        %v1480 = vpow.pop %v1479
        %v1481 = vmul.f32 %v1478, 1.442695
        %v1482 = vpow.pop %v1481
        %v1483 = vadd.f32 %v1480, 1.0
        %v1484 = vadd.f32 %v1482, 1.0
        %v1485 = vrcp.pop %v1483
        %v1486 = vmul.f32 1.0, %v1485
        %v1487 = vrcp.pop %v1484
        %v1488 = vmul.f32 1.0, %v1487
        %v1489 = vmul.f32 %v1468, %v362
        %v1490 = vmul.f32 %v1470, %v363
        %s1491 = sld [smem:[#allocation13]]
        %v1492 = vstv %s1491
        %v1493 = vmul.f32 %v1489, %v1492
        %v1494 = vmul.f32 %v1490, %v1492
        %v1495 = vmul.f32 %v1486, %v373
        %v1496 = vmul.f32 %v1488, %v374
        %s1497 = sld [smem:[#allocation14]]
        %v1498 = vstv %s1497
        %v1499 = vmul.f32 %v1495, %v1498
        %v1500 = vmul.f32 %v1496, %v1498
        %v1501 = vadd.f32 %v1493, %v1499
        %v1502 = vadd.f32 %v1494, %v1500
        %1503 = vst.msk [vmem:[%s361] sm:$0xff] %vm384, %v1501
        %1504 = vst.msk [vmem:[%s361 + $0x8] sm:$0xff] %vm384, %v1502
        %v1505 = vmul.f32 %v1468, %v365
        %v1506 = vmul.f32 %v1470, %v366
        %s1507 = sld [smem:[#allocation13 + $0x1]]
        %v1508 = vstv %s1507
        %v1509 = vmul.f32 %v1505, %v1508
        %v1510 = vmul.f32 %v1506, %v1508
        %v1511 = vmul.f32 %v1486, %v376
        %v1512 = vmul.f32 %v1488, %v377
        %s1513 = sld [smem:[#allocation14 + $0x1]]
        %v1514 = vstv %s1513
        %v1515 = vmul.f32 %v1511, %v1514
        %v1516 = vmul.f32 %v1512, %v1514
        %v1517 = vadd.f32 %v1509, %v1515
        %v1518 = vadd.f32 %v1510, %v1516
        %s1519 = scalar_lea.vmem %s361, 16 [#allocation16]
        %1520 = vst.msk [vmem:[%s1519] sm:$0xff] %vm384, %v1517
        %1521 = vst.msk [vmem:[%s1519 + $0x8] sm:$0xff] %vm384, %v1518
        %v1522 = vmul.f32 %v1468, %v368
        %v1523 = vmul.f32 %v1470, %v369
        %s1524 = sld [smem:[#allocation13 + $0x2]]
        %v1525 = vstv %s1524
        %v1526 = vmul.f32 %v1522, %v1525
        %v1527 = vmul.f32 %v1523, %v1525
        %v1528 = vmul.f32 %v1486, %v379
        %v1529 = vmul.f32 %v1488, %v380
        %s1530 = sld [smem:[#allocation14 + $0x2]]
        %v1531 = vstv %s1530
        %v1532 = vmul.f32 %v1528, %v1531
        %v1533 = vmul.f32 %v1529, %v1531
        %v1534 = vadd.f32 %v1526, %v1532
        %v1535 = vadd.f32 %v1527, %v1533
        %s1536 = scalar_lea.vmem %s361, 32 [#allocation16]
        %1537 = vst.msk [vmem:[%s1536] sm:$0xff] %vm384, %v1534
        %1538 = vst.msk [vmem:[%s1536 + $0x8] sm:$0xff] %vm384, %v1535
        %v1539 = vmul.f32 %v1468, %v371
        %v1540 = vmul.f32 %v1470, %v372
        %s1541 = sld [smem:[#allocation13 + $0x3]]
        %v1542 = vstv %s1541
        %v1543 = vmul.f32 %v1539, %v1542
        %v1544 = vmul.f32 %v1540, %v1542
        %v1545 = vmul.f32 %v1486, %v382
        %v1546 = vmul.f32 %v1488, %v383
        %s1547 = sld [smem:[#allocation14 + $0x3]]
        %v1548 = vstv %s1547
        %v1549 = vmul.f32 %v1545, %v1548
        %v1550 = vmul.f32 %v1546, %v1548
        %v1551 = vadd.f32 %v1543, %v1549
        %v1552 = vadd.f32 %v1544, %v1550
        %s1553 = scalar_lea.vmem %s361, 48 [#allocation16]
        %1554 = vst.msk [vmem:[%s1553] sm:$0xff] %vm384, %v1551
        %1555 = vst.msk [vmem:[%s1553 + $0x8] sm:$0xff] %vm384, %v1552
        %s1556 = sand.u32 %s173, 1
        %s1557 = scalar_lea.sflag [#allocation6], %s1556
        %s1558 = sand.u32 %s173, 1
        %s1559 = smul.addr %s1558, 64
        %s1560 = scalar_lea.vmem [#allocation16], %s1559
        // Predicated region
        $region69: #{tpu_custom_call.1} parent=43 // pred_check
          %p1561 = pneg %p183
        $region70: #{tpu_custom_call.1} parent=43 // pred_check_branch
          %1563 = sbr.rel (%p1561) target = $region72
        $region71: #{tpu_custom_call.1} parent=43 // pred_region
          %s1565 = ssub.s32 1024, 1024
          %1566 = vsyncadd %s1557, %s1565
          %s1567 = smul.addr %s29, 8
          %s1568 = smul.addr %s1567, 128
          %s1569 = scalar_lea.hbm %s6, %s1568
          %s1570 = sshll.u32 %s1560, 4
          %s1571 = int_to_ptr.vmem [resolvable:$true] %s1570
          %1576 = dma.vmem_to_hbm [thread:$0]  %s1571, 1024, %s1569, %s1557, 128, 128, 8
        $region72: #{tpu_custom_call.1} parent=43 // pred_fallthru
          _
      $region44: #{tpu_custom_call.1} parent=5 // pred_fallthru
        _
      %p1577 = scmp.le.s32.totalorder 2, %s24
      // Predicated region
      $region73: #{tpu_custom_call.1} parent=5 // pred_check
        %p1578 = pneg %p1577
      $region74: #{tpu_custom_call.1} parent=5 // pred_check_branch
        %1580 = sbr.rel (%p1578) target = $region76
      $region75: #{tpu_custom_call.1} parent=5 // pred_region
        %s1581 = ssub.s32 %s24, 2
        // Predicated region
        $region77: #{tpu_custom_call.1} parent=75 // pred_check
          %p1582 = pneg %p189
        $region78: #{tpu_custom_call.1} parent=75 // pred_check_branch
          %1584 = sbr.rel (%p1582) target = $region80
        $region79: #{tpu_custom_call.1} parent=75 // pred_region
          %s1585 = sand.u32 %s174, 1
          %s1586 = scalar_lea.sflag [#allocation6], %s1585
          %s1587 = sand.u32 %s174, 1
          %s1588 = smul.addr %s1587, 64
          %s1589 = scalar_lea.vmem [#allocation16], %s1588
          %1590 = dma.done %s1586, 1024
        $region80: #{tpu_custom_call.1} parent=75 // pred_fallthru
          _
      $region76: #{tpu_custom_call.1} parent=5 // pred_fallthru
        _
    $region6: #{tpu_custom_call.1} parent=1 // loop_footer
      %s28 = sadd.s32 1, %s24
    $region7: #{tpu_custom_call.1} parent=1 // loop_footer_branch
      %23 = sbr.rel target = $region3
    $region8: #{tpu_custom_call.1} parent=1 // loop_exit
      _
    %1591 = vsyncpa [#allocation5], 1
    %s1592 = scalar_lea.sflag [#allocation5], 1
    %1593 = vsyncpa %s1592, 1
    %1594 = vsyncpa [#allocation9], 1
    %s1595 = scalar_lea.sflag [#allocation9], 1
    %1596 = vsyncpa %s1595, 1
    %1597 = vsyncpa [#allocation6], 1
    %s1598 = scalar_lea.sflag [#allocation6], 1
    %1599 = vsyncpa %s1598, 1
    %1600 = vsyncpa [#allocation7], 1
    %s1601 = scalar_lea.sflag [#allocation7], 1
    %1602 = vsyncpa %s1601, 1
    %1603 = vsyncpa [#allocation12], 1
    %1604 = vsyncpa [#allocation15], 1

</llo_original>
